<compile_context>
chip_gen: v6e
topology: v6e:2x2x1
jax: 0.10.0
libtpu: 0.0.40
codegen_flags: <defaults>
</compile_context>

<pallas_src>
import functools

import jax
import jax.numpy as jnp
from jax.experimental import pallas as pl
from jax.experimental.pallas import tpu as pltpu

NUM_SPECIAL_TOKENS = 2


# ----------------------------------------------------------------------------
# Kernel 1: one LSTM time-step over n_layers.
# ----------------------------------------------------------------------------
def _lstm_step_kernel(x_ref, h_ref, c_ref, whh_ref, b_ref, *rest,
                      n_layers, hid_dim):
    wih_refs = rest[:n_layers]                     # per-layer (E or H, 4H) bf16
    h_out_ref = rest[n_layers]
    c_out_ref = rest[n_layers + 1]
    H = hid_dim

    # Hoisted recurrent contribution: depends only on the incoming hidden
    # state, so all L matmuls (plus the fused bias) run back-to-back on the
    # MXU before the layer-serial chain starts.
    rec = jnp.einsum(
        "lbh,lhg->lbg",
        h_ref[...].astype(jnp.bfloat16),
        whh_ref[...],
        preferred_element_type=jnp.float32,
    ) + b_ref[...]                                  # (L, B, 4H) f32

    x = x_ref[...]                                  # (B, E) bf16 (embedding row)
    for l in range(n_layers):                       # static unrolled loop
        gates = jnp.dot(x.astype(jnp.bfloat16), wih_refs[l][...],
                        preferred_element_type=jnp.float32) + rec[l]  # (B, 4H)

        i_g = jax.nn.sigmoid(gates[:, 0 * H:1 * H])
        f_g = jax.nn.sigmoid(gates[:, 1 * H:2 * H])
        g_g = jnp.tanh(gates[:, 2 * H:3 * H])
        o_g = jax.nn.sigmoid(gates[:, 3 * H:4 * H])

        c_new = f_g * c_ref[l].astype(jnp.float32) + i_g * g_g
        h_new = o_g * jnp.tanh(c_new)

        h_out_ref[l] = h_new
        c_out_ref[l] = c_new
        x = h_new                                   # feeds next layer


# ----------------------------------------------------------------------------
# Kernel 2: fc_out vocab projection, tiled over V ("parallel" grid axis).
# ----------------------------------------------------------------------------
def _fc_out_kernel(h_ref, w_ref, b_ref, out_ref):
    out_ref[...] = (jnp.dot(h_ref[...].astype(jnp.bfloat16), w_ref[...],
                            preferred_element_type=jnp.float32)
                    + b_ref[...])


def _pick_vocab_tile(v):
    """Largest 128-multiple tile (<= 2048) that divides V; fall back to V."""
    if v % 128 != 0:
        return v
    for cand in (2048, 1024, 512, 256, 128):
        if v % cand == 0:
            return cand
    return v


# ----------------------------------------------------------------------------
# Wrapper (glue): embedding gather + two pallas_calls.
# ----------------------------------------------------------------------------
def _decoder_forward_impl(tokens, hidden, cell, params, *, n_layers, hid_dim):
    """tokens: (B,) int32; hidden/cell: (L, B, H) float32."""
    B = tokens.shape[0]
    L, _, H = hidden.shape
    assert L == n_layers and H == hid_dim

    # Embedding lookup (glue gather; hot path lives in the kernels).
    # TODO(synk): for full autoregressive decoding, loop tokens inside one
    # kernel with scalar-prefetched token ids so weights stay VMEM-resident.
    embedded = jnp.take(params["embedding"], tokens, axis=0)       # (B, E) bf16

    whh = params["whh"]              # (L, H, 4H)   bf16
    b = params["b"]                  # (L, 1, 4H)   f32 (b_ih + b_hh)
    wihs = params["wih"]             # list: [(E,4H)] + [(H,4H)] * (L-1), bf16
    wout = params["wout"]            # (H, V)       bf16
    bout = params["bout"]            # (1, V)       f32
    V = wout.shape[1]

    vmem = pl.BlockSpec(memory_space=pltpu.MemorySpace.VMEM)
    lstm_inputs = [embedded, hidden, cell, whh, b] + list(wihs)

    # Scoped-VMEM limit sized to actual footprint (headroom for double buffers),
    # capped at v7x's 64 MiB physical VMEM so it is valid on every chip.
    footprint = sum(int(x.size) * x.dtype.itemsize for x in lstm_inputs)
    footprint += 2 * int(hidden.size) * hidden.dtype.itemsize
    vmem_limit = int(min(64 * 1024 * 1024,
                         max(2 * footprint + (2 << 20), 16 << 20)))

    lstm_kernel = functools.partial(_lstm_step_kernel,
                                    n_layers=n_layers, hid_dim=hid_dim)

    h_out, c_out = pl.pallas_call(
        lstm_kernel,
        out_shape=(jax.ShapeDtypeStruct((L, B, H), jnp.float32),
                   jax.ShapeDtypeStruct((L, B, H), jnp.float32)),
        in_specs=[vmem] * len(lstm_inputs),
        out_specs=(vmem, vmem),
        input_output_aliases={1: 0, 2: 1},   # hidden -> h_out, cell -> c_out
        compiler_params=pltpu.CompilerParams(vmem_limit_bytes=vmem_limit),
    )(*lstm_inputs)

    h_top = h_out[n_layers - 1]               # (B, H) top-layer output (glue slice)

    TN = _pick_vocab_tile(V)
    pred = pl.pallas_call(
        _fc_out_kernel,
        out_shape=jax.ShapeDtypeStruct((B, V), jnp.float32),
        grid=(V // TN,),
        in_specs=[pl.BlockSpec((B, H), lambda j: (0, 0)),
                  pl.BlockSpec((H, TN), lambda j: (0, j)),
                  pl.BlockSpec((1, TN), lambda j: (0, j))],
        out_specs=pl.BlockSpec((B, TN), lambda j: (0, j)),
        compiler_params=pltpu.CompilerParams(
            dimension_semantics=("parallel",)),
    )(h_top, wout, bout)

    return pred, h_out, c_out


decoder_forward = jax.jit(_decoder_forward_impl,
                          static_argnames=("n_layers", "hid_dim"))


# ----------------------------------------------------------------------------
# Deterministic parameter construction (synthetic; mirrors nn.Module shapes).
# ----------------------------------------------------------------------------
def init_params(key, output_dim, emb_dim, hid_dim, n_layers):
    V = output_dim + NUM_SPECIAL_TOKENS
    ks = jax.random.split(key, n_layers + 6)
    s = 1.0 / jnp.sqrt(hid_dim)

    emb = (jax.random.normal(ks[0], (V, emb_dim), jnp.float32) * 0.1
           ).astype(jnp.bfloat16)

    # PyTorch LSTM weights: W_ih_l (4H, in), W_hh_l (4H, H); stored pre-transposed.
    wih = []
    for l in range(n_layers):
        in_dim = emb_dim if l == 0 else hid_dim
        wih.append(jax.random.uniform(ks[1 + l], (in_dim, 4 * hid_dim),
                                      jnp.float32, -s, s).astype(jnp.bfloat16))
    whh = jax.random.uniform(ks[1 + n_layers],
                             (n_layers, hid_dim, 4 * hid_dim),
                             jnp.float32, -s, s).astype(jnp.bfloat16)
    b_ih = jax.random.uniform(ks[2 + n_layers], (n_layers, 1, 4 * hid_dim),
                              jnp.float32, -s, s)
    b_hh = jax.random.uniform(ks[3 + n_layers], (n_layers, 1, 4 * hid_dim),
                              jnp.float32, -s, s)
    wout = jax.random.uniform(ks[4 + n_layers], (hid_dim, V),
                              jnp.float32, -s, s).astype(jnp.bfloat16)
    bout = jax.random.uniform(ks[5 + n_layers], (1, V), jnp.float32, -s, s)

    return {"embedding": emb, "wih": wih, "whh": whh,
            "b": b_ih + b_hh, "wout": wout, "bout": bout}


# Pure-JAX reference of the same step/math (bf16 weights, f32 accumulation).
def _reference(tokens, hidden, cell, params, n_layers, hid_dim):
    H = hid_dim
    x = jnp.take(params["embedding"], tokens, axis=0)
    rec = jnp.einsum("lbh,lhg->lbg", hidden.astype(jnp.bfloat16),
                     params["whh"],
                     preferred_element_type=jnp.float32) + params["b"]
    h_out, c_out = [], []
    for l in range(n_layers):
        gates = jnp.dot(x.astype(jnp.bfloat16), params["wih"][l],
                        preferred_element_type=jnp.float32) + rec[l]
        i_g = jax.nn.sigmoid(gates[:, 0:H])
        f_g = jax.nn.sigmoid(gates[:, H:2 * H])
        g_g = jnp.tanh(gates[:, 2 * H:3 * H])
        o_g = jax.nn.sigmoid(gates[:, 3 * H:4 * H])
        c_new = f_g * cell[l] + i_g * g_g
        h_new = o_g * jnp.tanh(c_new)
        h_out.append(h_new)
        c_out.append(c_new)
        x = h_new
    pred = jnp.dot(x.astype(jnp.bfloat16), params["wout"],
                   preferred_element_type=jnp.float32) + params["bout"]
    return pred, jnp.stack(h_out), jnp.stack(c_out)


if __name__ == "__main__":
    # Small, lane-aligned shapes consistent with Decoder(output_dim, emb_dim,
    # hid_dim, n_layers): V = 256, E = H = 128, 2 layers, batch 8.
    output_dim, emb_dim, hid_dim, n_layers = 254, 128, 128, 2
    batch = 8
    vocab = output_dim + NUM_SPECIAL_TOKENS

    key = jax.random.PRNGKey(0)
    k_tok, k_h, k_c, k_p = jax.random.split(key, 4)

    tokens = jax.random.randint(k_tok, (batch,), 0, vocab, jnp.int32)    # (B,)
    hidden = jax.random.normal(k_h, (n_layers, batch, hid_dim), jnp.float32)
    cell = jax.random.normal(k_c, (n_layers, batch, hid_dim), jnp.float32)
    params = init_params(k_p, output_dim, emb_dim, hid_dim, n_layers)

    # Reference first (the kernel call aliases / may donate hidden & cell).
    pred_r, h_r, c_r = _reference(tokens, hidden, cell, params,
                                  n_layers, hid_dim)

    pred, h_new, c_new = decoder_forward(tokens, hidden, cell, params,
                                         n_layers=n_layers, hid_dim=hid_dim)
    jax.block_until_ready((pred, h_new, c_new))

    assert jnp.allclose(pred, pred_r, atol=1e-2, rtol=1e-2)
    assert jnp.allclose(h_new, h_r, atol=1e-2, rtol=1e-2)
    assert jnp.allclose(c_new, c_r, atol=1e-2, rtol=1e-2)

    print("KERNEL_OK")
</pallas_src>

<mosaic_0001>
module attributes {stable_mosaic.version = 11 : i64} {
  func.func @_fc_out_kernel(%arg0: i32, %arg1: memref<8x128xf32, #tpu.memory_space<vmem>>, %arg2: memref<128x256xbf16, #tpu.memory_space<vmem>>, %arg3: memref<1x256xf32, #tpu.memory_space<vmem>>, %arg4: memref<8x256xf32, #tpu.memory_space<vmem>>) attributes {dimension_semantics = [#tpu.dimension_semantics<parallel>], iteration_bounds = array<i64: 1>, scalar_prefetch = 0 : i64, scratch_operands = 0 : i64, tpu.core_type = #tpu.core_type<tc>, window_params = [{pipeline_mode = #tpu.pipeline_mode<synchronous>, transform_indices = @transform_0, window_bounds = array<i64: 8, 128>}, {transform_indices = @transform_1, window_bounds = array<i64: 128, 256>}, {transform_indices = @transform_2, window_bounds = array<i64: 1, 256>}, {transform_indices = @transform_3, window_bounds = array<i64: 8, 256>}]} {
    %c0 = arith.constant 0 : index
    %c0_0 = arith.constant 0 : index
    %0 = vector.load %arg1[%c0, %c0_0] : memref<8x128xf32, #tpu.memory_space<vmem>>, vector<8x128xf32>
    %1 = arith.truncf %0 : vector<8x128xf32> to vector<8x128xbf16>
    %c0_1 = arith.constant 0 : index
    %c0_2 = arith.constant 0 : index
    %2 = vector.load %arg2[%c0_1, %c0_2] : memref<128x256xbf16, #tpu.memory_space<vmem>>, vector<128x256xbf16>
    %cst = arith.constant dense<0.000000e+00> : vector<8x256xf32>
    %3 = tpu.matmul %1, %2, %cst {dimension_numbers = #tpu.dot_dimension_numbers<[1], [0], [0], [1], [0, 0, 1, 1], [], []>} : vector<8x128xbf16>, vector<128x256xbf16>, vector<8x256xf32> -> vector<8x256xf32>
    %c0_3 = arith.constant 0 : index
    %c0_4 = arith.constant 0 : index
    %4 = vector.load %arg3[%c0_3, %c0_4] : memref<1x256xf32, #tpu.memory_space<vmem>>, vector<1x256xf32>
    %5 = vector.broadcast %4 : vector<1x256xf32> to vector<8x256xf32>
    %6 = arith.addf %3, %5 : vector<8x256xf32>
    %c0_5 = arith.constant 0 : index
    %c0_6 = arith.constant 0 : index
    %7 = vector.load %arg4[%c0_5, %c0_6] : memref<8x256xf32, #tpu.memory_space<vmem>>, vector<8x256xf32>
    tpu.vector_store %arg4[%c0_5, %c0_6], %6 {strides = array<i32>} : memref<8x256xf32, #tpu.memory_space<vmem>>, vector<8x256xf32>,
    return
  }
  func.func @transform_0(%arg0: i32) -> (i32, i32) {
    %c0_i32 = arith.constant 0 : i32
    %c0_i32_0 = arith.constant 0 : i32
    %c0_i32_1 = arith.constant 0 : i32
    return %c0_i32, %c0_i32_0 : i32, i32
  }
  func.func @transform_1(%arg0: i32) -> (i32, i32) {
    %c0_i32 = arith.constant 0 : i32
    %c0_i32_0 = arith.constant 0 : i32
    return %c0_i32, %arg0 : i32, i32
  }
  func.func @transform_2(%arg0: i32) -> (i32, i32) {
    %c0_i32 = arith.constant 0 : i32
    %c0_i32_0 = arith.constant 0 : i32
    return %c0_i32, %arg0 : i32, i32
  }
  func.func @transform_3(%arg0: i32) -> (i32, i32) {
    %c0_i32 = arith.constant 0 : i32
    %c0_i32_0 = arith.constant 0 : i32
    return %c0_i32, %arg0 : i32, i32
  }
}

module attributes {stable_mosaic.version = 11 : i64} {
  func.func @_lstm_step_kernel(%arg0: memref<8x128xbf16, #tpu.memory_space<vmem>>, %arg1: memref<2x8x128xf32, #tpu.memory_space<vmem>>, %arg2: memref<2x8x128xf32, #tpu.memory_space<vmem>>, %arg3: memref<2x128x512xbf16, #tpu.memory_space<vmem>>, %arg4: memref<2x1x512xf32, #tpu.memory_space<vmem>>, %arg5: memref<128x512xbf16, #tpu.memory_space<vmem>>, %arg6: memref<128x512xbf16, #tpu.memory_space<vmem>>, %arg7: memref<2x8x128xf32, #tpu.memory_space<vmem>>, %arg8: memref<2x8x128xf32, #tpu.memory_space<vmem>>) attributes {dimension_semantics = [], scalar_prefetch = 0 : i64, scratch_operands = 0 : i64, tpu.core_type = #tpu.core_type<tc>} {
    %c0 = arith.constant 0 : index
    %c0_0 = arith.constant 0 : index
    %c0_1 = arith.constant 0 : index
    %0 = vector.load %arg1[%c0, %c0_0, %c0_1] : memref<2x8x128xf32, #tpu.memory_space<vmem>>, vector<2x8x128xf32>
    %1 = arith.truncf %0 : vector<2x8x128xf32> to vector<2x8x128xbf16>
    %c0_2 = arith.constant 0 : index
    %c0_3 = arith.constant 0 : index
    %c0_4 = arith.constant 0 : index
    %2 = vector.load %arg3[%c0_2, %c0_3, %c0_4] : memref<2x128x512xbf16, #tpu.memory_space<vmem>>, vector<2x128x512xbf16>
    "tpu.trace_start"() <{level = 10 : i32, message = "lbh,lhg->lbg"}> : () -> ()
    %cst = arith.constant dense<0.000000e+00> : vector<2x8x512xf32>
    %3 = tpu.matmul %1, %2, %cst {dimension_numbers = #tpu.dot_dimension_numbers<[2], [1], [1], [2], [0, 0, 0, 1, 1, 2], [0], [0]>} : vector<2x8x128xbf16>, vector<2x128x512xbf16>, vector<2x8x512xf32> -> vector<2x8x512xf32>
    "tpu.trace_stop"() : () -> ()
    %c0_5 = arith.constant 0 : index
    %c0_6 = arith.constant 0 : index
    %c0_7 = arith.constant 0 : index
    %4 = vector.load %arg4[%c0_5, %c0_6, %c0_7] : memref<2x1x512xf32, #tpu.memory_space<vmem>>, vector<2x1x512xf32>
    %5 = vector.broadcast %4 : vector<2x1x512xf32> to vector<2x8x512xf32>
    %6 = arith.addf %3, %5 : vector<2x8x512xf32>
    %c0_8 = arith.constant 0 : index
    %c0_9 = arith.constant 0 : index
    %7 = vector.load %arg0[%c0_8, %c0_9] : memref<8x128xbf16, #tpu.memory_space<vmem>>, vector<8x128xbf16>
    %c0_10 = arith.constant 0 : index
    %c0_11 = arith.constant 0 : index
    %8 = vector.load %arg5[%c0_10, %c0_11] : memref<128x512xbf16, #tpu.memory_space<vmem>>, vector<128x512xbf16>
    %cst_12 = arith.constant dense<0.000000e+00> : vector<8x512xf32>
    %9 = tpu.matmul %7, %8, %cst_12 {dimension_numbers = #tpu.dot_dimension_numbers<[1], [0], [0], [1], [0, 0, 1, 1], [], []>} : vector<8x128xbf16>, vector<128x512xbf16>, vector<8x512xf32> -> vector<8x512xf32>
    %10 = vector.extract_strided_slice %6 {offsets = [0, 0, 0], sizes = [1, 8, 512], strides = [1, 1, 1]} : vector<2x8x512xf32> to vector<1x8x512xf32>
    %11 = vector.shape_cast %10 : vector<1x8x512xf32> to vector<8x512xf32>
    %12 = arith.addf %9, %11 : vector<8x512xf32>
    %13 = vector.extract_strided_slice %12 {offsets = [0, 0], sizes = [8, 128], strides = [1, 1]} : vector<8x512xf32> to vector<8x128xf32>
    %14 = arith.negf %13 : vector<8x128xf32>
    %15 = math.exp %14 : vector<8x128xf32>
    %cst_13 = arith.constant 1.000000e+00 : f32
    %16 = vector.broadcast %cst_13 : f32 to vector<8x128xf32>
    %17 = arith.addf %16, %15 : vector<8x128xf32>
    %18 = arith.divf %16, %17 : vector<8x128xf32>
    %19 = vector.extract_strided_slice %12 {offsets = [0, 128], sizes = [8, 128], strides = [1, 1]} : vector<8x512xf32> to vector<8x128xf32>
    %20 = arith.negf %19 : vector<8x128xf32>
    %21 = math.exp %20 : vector<8x128xf32>
    %cst_14 = arith.constant 1.000000e+00 : f32
    %22 = vector.broadcast %cst_14 : f32 to vector<8x128xf32>
    %23 = arith.addf %22, %21 : vector<8x128xf32>
    %24 = arith.divf %22, %23 : vector<8x128xf32>
    %25 = vector.extract_strided_slice %12 {offsets = [0, 256], sizes = [8, 128], strides = [1, 1]} : vector<8x512xf32> to vector<8x128xf32>
    %26 = math.tanh %25 : vector<8x128xf32>
    %27 = vector.extract_strided_slice %12 {offsets = [0, 384], sizes = [8, 128], strides = [1, 1]} : vector<8x512xf32> to vector<8x128xf32>
    %28 = arith.negf %27 : vector<8x128xf32>
    %29 = math.exp %28 : vector<8x128xf32>
    %cst_15 = arith.constant 1.000000e+00 : f32
    %30 = vector.broadcast %cst_15 : f32 to vector<8x128xf32>
    %31 = arith.addf %30, %29 : vector<8x128xf32>
    %32 = arith.divf %30, %31 : vector<8x128xf32>
    %c0_16 = arith.constant 0 : index
    %c0_17 = arith.constant 0 : index
    %c0_18 = arith.constant 0 : index
    %33 = vector.load %arg2[%c0_16, %c0_17, %c0_18] : memref<2x8x128xf32, #tpu.memory_space<vmem>>, vector<1x8x128xf32>
    %34 = vector.shape_cast %33 : vector<1x8x128xf32> to vector<8x128xf32>
    %35 = arith.mulf %24, %34 : vector<8x128xf32>
    %36 = arith.mulf %18, %26 : vector<8x128xf32>
    %37 = arith.addf %35, %36 : vector<8x128xf32>
    %38 = math.tanh %37 : vector<8x128xf32>
    %39 = arith.mulf %32, %38 : vector<8x128xf32>
    %c0_19 = arith.constant 0 : index
    %c0_20 = arith.constant 0 : index
    %c0_21 = arith.constant 0 : index
    %40 = vector.load %arg7[%c0_19, %c0_20, %c0_21] : memref<2x8x128xf32, #tpu.memory_space<vmem>>, vector<1x8x128xf32>
    %41 = vector.shape_cast %40 : vector<1x8x128xf32> to vector<8x128xf32>
    %42 = vector.shape_cast %39 : vector<8x128xf32> to vector<1x8x128xf32>
    tpu.vector_store %arg7[%c0_19, %c0_20, %c0_21], %42 {strides = array<i32>} : memref<2x8x128xf32, #tpu.memory_space<vmem>>, vector<1x8x128xf32>,
    %c0_22 = arith.constant 0 : index
    %c0_23 = arith.constant 0 : index
    %c0_24 = arith.constant 0 : index
    %43 = vector.load %arg8[%c0_22, %c0_23, %c0_24] : memref<2x8x128xf32, #tpu.memory_space<vmem>>, vector<1x8x128xf32>
    %44 = vector.shape_cast %43 : vector<1x8x128xf32> to vector<8x128xf32>
    %45 = vector.shape_cast %37 : vector<8x128xf32> to vector<1x8x128xf32>
    tpu.vector_store %arg8[%c0_22, %c0_23, %c0_24], %45 {strides = array<i32>} : memref<2x8x128xf32, #tpu.memory_space<vmem>>, vector<1x8x128xf32>,
    %46 = arith.truncf %39 : vector<8x128xf32> to vector<8x128xbf16>
    %c0_25 = arith.constant 0 : index
    %c0_26 = arith.constant 0 : index
    %47 = vector.load %arg6[%c0_25, %c0_26] : memref<128x512xbf16, #tpu.memory_space<vmem>>, vector<128x512xbf16>
    %cst_27 = arith.constant dense<0.000000e+00> : vector<8x512xf32>
    %48 = tpu.matmul %46, %47, %cst_27 {dimension_numbers = #tpu.dot_dimension_numbers<[1], [0], [0], [1], [0, 0, 1, 1], [], []>} : vector<8x128xbf16>, vector<128x512xbf16>, vector<8x512xf32> -> vector<8x512xf32>
    %49 = vector.extract_strided_slice %6 {offsets = [1, 0, 0], sizes = [1, 8, 512], strides = [1, 1, 1]} : vector<2x8x512xf32> to vector<1x8x512xf32>
    %50 = vector.shape_cast %49 : vector<1x8x512xf32> to vector<8x512xf32>
    %51 = arith.addf %48, %50 : vector<8x512xf32>
    %52 = vector.extract_strided_slice %51 {offsets = [0, 0], sizes = [8, 128], strides = [1, 1]} : vector<8x512xf32> to vector<8x128xf32>
    %53 = arith.negf %52 : vector<8x128xf32>
    %54 = math.exp %53 : vector<8x128xf32>
    %cst_28 = arith.constant 1.000000e+00 : f32
    %55 = vector.broadcast %cst_28 : f32 to vector<8x128xf32>
    %56 = arith.addf %55, %54 : vector<8x128xf32>
    %57 = arith.divf %55, %56 : vector<8x128xf32>
    %58 = vector.extract_strided_slice %51 {offsets = [0, 128], sizes = [8, 128], strides = [1, 1]} : vector<8x512xf32> to vector<8x128xf32>
    %59 = arith.negf %58 : vector<8x128xf32>
    %60 = math.exp %59 : vector<8x128xf32>
    %cst_29 = arith.constant 1.000000e+00 : f32
    %61 = vector.broadcast %cst_29 : f32 to vector<8x128xf32>
    %62 = arith.addf %61, %60 : vector<8x128xf32>
    %63 = arith.divf %61, %62 : vector<8x128xf32>
    %64 = vector.extract_strided_slice %51 {offsets = [0, 256], sizes = [8, 128], strides = [1, 1]} : vector<8x512xf32> to vector<8x128xf32>
    %65 = math.tanh %64 : vector<8x128xf32>
    %66 = vector.extract_strided_slice %51 {offsets = [0, 384], sizes = [8, 128], strides = [1, 1]} : vector<8x512xf32> to vector<8x128xf32>
    %67 = arith.negf %66 : vector<8x128xf32>
    %68 = math.exp %67 : vector<8x128xf32>
    %cst_30 = arith.constant 1.000000e+00 : f32
    %69 = vector.broadcast %cst_30 : f32 to vector<8x128xf32>
    %70 = arith.addf %69, %68 : vector<8x128xf32>
    %71 = arith.divf %69, %70 : vector<8x128xf32>
    %c1 = arith.constant 1 : index
    %c0_31 = arith.constant 0 : index
    %c0_32 = arith.constant 0 : index
    %72 = vector.load %arg2[%c1, %c0_31, %c0_32] : memref<2x8x128xf32, #tpu.memory_space<vmem>>, vector<1x8x128xf32>
    %73 = vector.shape_cast %72 : vector<1x8x128xf32> to vector<8x128xf32>
    %74 = arith.mulf %63, %73 : vector<8x128xf32>
    %75 = arith.mulf %57, %65 : vector<8x128xf32>
    %76 = arith.addf %74, %75 : vector<8x128xf32>
    %77 = math.tanh %76 : vector<8x128xf32>
    %78 = arith.mulf %71, %77 : vector<8x128xf32>
    %c1_33 = arith.constant 1 : index
    %c0_34 = arith.constant 0 : index
    %c0_35 = arith.constant 0 : index
    %79 = vector.load %arg7[%c1_33, %c0_34, %c0_35] : memref<2x8x128xf32, #tpu.memory_space<vmem>>, vector<1x8x128xf32>
    %80 = vector.shape_cast %79 : vector<1x8x128xf32> to vector<8x128xf32>
    %81 = vector.shape_cast %78 : vector<8x128xf32> to vector<1x8x128xf32>
    tpu.vector_store %arg7[%c1_33, %c0_34, %c0_35], %81 {strides = array<i32>} : memref<2x8x128xf32, #tpu.memory_space<vmem>>, vector<1x8x128xf32>,
    %c1_36 = arith.constant 1 : index
    %c0_37 = arith.constant 0 : index
    %c0_38 = arith.constant 0 : index
    %82 = vector.load %arg8[%c1_36, %c0_37, %c0_38] : memref<2x8x128xf32, #tpu.memory_space<vmem>>, vector<1x8x128xf32>
    %83 = vector.shape_cast %82 : vector<1x8x128xf32> to vector<8x128xf32>
    %84 = vector.shape_cast %76 : vector<8x128xf32> to vector<1x8x128xf32>
    tpu.vector_store %arg8[%c1_36, %c0_37, %c0_38], %84 {strides = array<i32>} : memref<2x8x128xf32, #tpu.memory_space<vmem>>, vector<1x8x128xf32>,
    return
  }
}

</mosaic_0001>

<llo_original>
// kernel: _decoder_forward_impl.3
$region0: #{_decoder_forward_impl.3}
  #allocation0 [shape = 'u32[]', space=smem, size = 0x4, offset = 0x4, fixed_abs, tag = 'smem constant byte address 0x4 - core index']
  #allocation1 [shape = 'u32[144,128]{1,0:T(1,128)}', space=vmem, size = 0x12000, scoped, tag = 'internal scratch']
  %s0 = inlined_call_operand.vmem [shape: f32[8,128], index: 0, kind: input, shape index: {}]
  %s1 = inlined_call_operand.vmem [shape: bf16[128,256], index: 1, kind: input, shape index: {}]
  %s2 = inlined_call_operand.vmem [shape: f32[1,256], index: 2, kind: input, shape index: {}]
  %s3 = inlined_call_operand.hbm [shape: f32[8,256], index: 3, kind: output, shape index: {}]
  %s4 = sld [smem:[#allocation0]]
  $region22: #{_decoder_forward_impl.3} parent=0
    _
  %s6 = ssub.s32 1, %s4
  %s7 = scalar_select 0, %s6, %s4
  $region1: #{_decoder_forward_impl.3} parent=0
    #allocation2 [shape = 'u8[8192]{0}', space=vmem, size = 0x2000, scoped, tag = 'output window, operand 0, single buffered']
    #allocation3 [shape = 's32[1]{0}', space=sflag, size = 0x4, scoped, tag = 'scoped memory for _decoder_forward_impl.3']
    %8 = vsyncpa [#allocation3], 0
    // Predicated region
    $region2: #{_decoder_forward_impl.3} parent=1 // pred_check
      _
    $region3: #{_decoder_forward_impl.3} parent=1 // pred_check_branch
      %10 = sbr.rel (0) target = $region5
    $region4: #{_decoder_forward_impl.3} parent=1 // pred_region
      _
    $region5: #{_decoder_forward_impl.3} parent=1 // pred_fallthru
      _
    // Predicated region
    $region6: #{_decoder_forward_impl.3} parent=1 // pred_check
      _
    $region7: #{_decoder_forward_impl.3} parent=1 // pred_check_branch
      %12 = sbr.rel (0) target = $region9
    $region8: #{_decoder_forward_impl.3} parent=1 // pred_region
      _
    $region9: #{_decoder_forward_impl.3} parent=1 // pred_fallthru
      _
    // Predicated region
    $region10: #{_decoder_forward_impl.3} parent=1 // pred_check
      _
    $region11: #{_decoder_forward_impl.3} parent=1 // pred_check_branch
      %14 = sbr.rel (0) target = $region13
    $region12: #{_decoder_forward_impl.3} parent=1 // pred_region
      _
    $region13: #{_decoder_forward_impl.3} parent=1 // pred_fallthru
      _
    %v16 = vld [vmem:[%s0] sm:$0xff]
    %v17 = vpack.c.bf16 %v16, %v16
    %v18 = vld [vmem:[%s1] sm:$0xff]
    %v19 = vld [vmem:[%s1 + $0x8] sm:$0xff]
    %v20 = vld [vmem:[%s1 + $0x10] sm:$0xff]
    %v21 = vld [vmem:[%s1 + $0x18] sm:$0xff]
    %v22 = vld [vmem:[%s1 + $0x20] sm:$0xff]
    %v23 = vld [vmem:[%s1 + $0x28] sm:$0xff]
    %v24 = vld [vmem:[%s1 + $0x30] sm:$0xff]
    %v25 = vld [vmem:[%s1 + $0x38] sm:$0xff]
    %v26 = vld [vmem:[%s1 + $0x40] sm:$0xff]
    %v27 = vld [vmem:[%s1 + $0x48] sm:$0xff]
    %v28 = vld [vmem:[%s1 + $0x50] sm:$0xff]
    %v29 = vld [vmem:[%s1 + $0x58] sm:$0xff]
    %v30 = vld [vmem:[%s1 + $0x60] sm:$0xff]
    %v31 = vld [vmem:[%s1 + $0x68] sm:$0xff]
    %v32 = vld [vmem:[%s1 + $0x70] sm:$0xff]
    %v33 = vld [vmem:[%s1 + $0x78] sm:$0xff]
    %v34 = vld [vmem:[%s2] sm:$0x3]
    %v36 = vlaneseq
    %v37 = vshrl.u32 %v36, 7
    %v38 = vsub.s32 0, %v37
    %v39 = vrot.slane %v34, %v38
    %v40 = vlaneseq
    %v41 = vshrl.u32 %v40, 7
    %v42 = vsub.s32 1, %v41
    %v43 = vrot.slane %v34, %v42
    %v62 = vunpack.c.l.b16 %v18
    %v63 = vunpack.c.h.b16 %v18
    %v64 = vunpack.c.l.b16 %v19
    %v65 = vunpack.c.h.b16 %v19
    %v66 = vunpack.c.l.b16 %v20
    %v67 = vunpack.c.h.b16 %v20
    %v68 = vunpack.c.l.b16 %v21
    %v69 = vunpack.c.h.b16 %v21
    %v70 = vunpack.c.l.b16 %v22
    %v71 = vunpack.c.h.b16 %v22
    %v72 = vunpack.c.l.b16 %v23
    %v73 = vunpack.c.h.b16 %v23
    %v74 = vunpack.c.l.b16 %v24
    %v75 = vunpack.c.h.b16 %v24
    %v76 = vunpack.c.l.b16 %v25
    %v77 = vunpack.c.h.b16 %v25
    %v78 = vunpack.c.l.b16 %v26
    %v79 = vunpack.c.h.b16 %v26
    %v80 = vunpack.c.l.b16 %v27
    %v81 = vunpack.c.h.b16 %v27
    %v82 = vunpack.c.l.b16 %v28
    %v83 = vunpack.c.h.b16 %v28
    %v84 = vunpack.c.l.b16 %v29
    %v85 = vunpack.c.h.b16 %v29
    %v86 = vunpack.c.l.b16 %v30
    %v87 = vunpack.c.h.b16 %v30
    %v88 = vunpack.c.l.b16 %v31
    %v89 = vunpack.c.h.b16 %v31
    %v90 = vunpack.c.l.b16 %v32
    %v91 = vunpack.c.h.b16 %v32
    %v92 = vunpack.c.l.b16 %v33
    %v93 = vunpack.c.h.b16 %v33
    %v94 = vpack.c.b16 %v64, %v62
    %v95 = vpack.c.b16 %v65, %v63
    %v96 = vpack.c.b16 %v68, %v66
    %v97 = vpack.c.b16 %v69, %v67
    %v98 = vpack.c.b16 %v72, %v70
    %v99 = vpack.c.b16 %v73, %v71
    %v100 = vpack.c.b16 %v76, %v74
    %v101 = vpack.c.b16 %v77, %v75
    %v102 = vpack.c.b16 %v80, %v78
    %v103 = vpack.c.b16 %v81, %v79
    %v104 = vpack.c.b16 %v84, %v82
    %v105 = vpack.c.b16 %v85, %v83
    %v106 = vpack.c.b16 %v88, %v86
    %v107 = vpack.c.b16 %v89, %v87
    %v108 = vpack.c.b16 %v92, %v90
    %v109 = vpack.c.b16 %v93, %v91
    %126 = vmatprep.subr.bf16.mxu0 %v109
    %127 = vmatpush1.bf16.msra.mxu0 %v108
    %128 = vmatprep.subr.bf16.mxu0 %v107
    %129 = vmatpush1.bf16.msra.mxu0 %v106
    %130 = vmatprep.subr.bf16.mxu0 %v105
    %131 = vmatpush1.bf16.msra.mxu0 %v104
    %132 = vmatprep.subr.bf16.mxu0 %v103
    %133 = vmatpush1.bf16.msra.mxu0 %v102
    %134 = vmatprep.subr.bf16.mxu0 %v101
    %135 = vmatpush1.bf16.msra.mxu0 %v100
    %136 = vmatprep.subr.bf16.mxu0 %v99
    %137 = vmatpush1.bf16.msra.mxu0 %v98
    %138 = vmatprep.subr.bf16.mxu0 %v97
    %139 = vmatpush1.bf16.msra.mxu0 %v96
    %140 = vmatprep.subr.bf16.mxu0 %v95
    %141 = vmatpush1.bf16.msra.mxu0 %v94
    %142 = vmatprep.subr.bf16.mxu0 0
    %143 = vmatpush2.bf16.msra.mxu0 0
    %144 = vmatprep.subr.bf16.mxu0 0
    %145 = vmatpush2.bf16.msra.mxu0 0
    %146 = vmatprep.subr.bf16.mxu0 0
    %147 = vmatpush2.bf16.msra.mxu0 0
    %148 = vmatprep.subr.bf16.mxu0 0
    %149 = vmatpush2.bf16.msra.mxu0 0
    %150 = vmatprep.subr.bf16.mxu0 0
    %151 = vmatpush2.bf16.msra.mxu0 0
    %152 = vmatprep.subr.bf16.mxu0 0
    %153 = vmatpush2.bf16.msra.mxu0 0
    %154 = vmatprep.subr.bf16.mxu0 0
    %155 = vmatpush2.bf16.msra.mxu0 0
    %156 = vmatprep.subr.bf16.mxu0 0
    %157 = vmatpush2.bf16.msra.mxu0 0
    %158 = vmatprep.mubr.bf16.mxu0 0
    %159 = vmatmul.mubr.bf16.gmra.mxu0 %v17
    %v160 = vpop.f32.mrf.mxu0
    %v161 = vadd.f32 %v39, %v160
    %v162 = vpop.f32.mrf.mxu0
    %v163 = vadd.f32 %v43, %v162
    %v164 = vpop.f32.mrf.mxu0
    %v165 = vpop.f32.mrf.mxu0
    %166 = vdwg.mxu0
    %167 = vst [vmem:[#allocation2] sm:$0xff] %v161
    %168 = vst [vmem:[#allocation2 + $0x8] sm:$0xff] %v163
    // Predicated region
    $region14: #{_decoder_forward_impl.3} parent=1 // pred_check
      _
    $region15: #{_decoder_forward_impl.3} parent=1 // pred_check_branch
      %170 = sbr.rel (0) target = $region17
    $region16: #{_decoder_forward_impl.3} parent=1 // pred_region
      %s172 = ssub.s32 256, 256
      %173 = vsyncadd [#allocation3], %s172
      %s175 = sshll.u32 [#allocation2], 4
      %s176 = int_to_ptr.vmem [resolvable:$true] %s175
      %178 = dma.vmem_to_hbm [thread:$0]  %s176, 256, %s3, [#allocation3]
    $region17: #{_decoder_forward_impl.3} parent=1 // pred_fallthru
      _
    // Predicated region
    $region18: #{_decoder_forward_impl.3} parent=1 // pred_check
      _
    $region19: #{_decoder_forward_impl.3} parent=1 // pred_check_branch
      %180 = sbr.rel (0) target = $region21
    $region20: #{_decoder_forward_impl.3} parent=1 // pred_region
      %181 = dma.done [#allocation3], 256
    $region21: #{_decoder_forward_impl.3} parent=1 // pred_fallthru
      _
    %182 = vsyncpa [#allocation3], 1

// kernel: _decoder_forward_impl.2
$region0: #{_decoder_forward_impl.2}
  #allocation0 [shape = 'u32[]', space=smem, size = 0x4, offset = 0x4, fixed_abs, tag = 'smem constant byte address 0x4 - core index']
  #allocation1 [shape = 'u32[144,128]{1,0:T(1,128)}', space=vmem, size = 0x12000, scoped, tag = 'internal scratch']
  %s0 = inlined_call_operand.vmem [shape: bf16[8,128], index: 0, kind: input, shape index: {}]
  %s1 = inlined_call_operand.vmem [shape: f32[2,8,128], index: 1, kind: input, shape index: {}, may-alias: {1,7}]
  %s2 = inlined_call_operand.vmem [shape: f32[2,8,128], index: 2, kind: input, shape index: {}, may-alias: {2,8}]
  %s3 = inlined_call_operand.hbm [shape: bf16[2,128,512], index: 3, kind: input, shape index: {}]
  %s4 = inlined_call_operand.vmem [shape: f32[2,1,512], index: 4, kind: input, shape index: {}]
  %s5 = inlined_call_operand.hbm [shape: bf16[128,512], index: 5, kind: input, shape index: {}]
  %s6 = inlined_call_operand.hbm [shape: bf16[128,512], index: 6, kind: input, shape index: {}]
  %s7 = inlined_call_operand.vmem [shape: f32[2,8,128], index: 7, kind: output, shape index: {0}, may-alias: {1,7}]
  %s8 = inlined_call_operand.vmem [shape: f32[2,8,128], index: 8, kind: output, shape index: {1}, may-alias: {2,8}]
  %9 = xla_tuple %s7, %s8
  %s10 = sld [smem:[#allocation0]]
  $region58: #{_decoder_forward_impl.2} parent=0
    _
  %s12 = ssub.s32 1, %s10
  %s13 = scalar_select 0, %s12, %s10
  $region1: #{_decoder_forward_impl.2} parent=0
    #allocation2 [shape = 'u8[262144]{0}', space=vmem, size = 0x40000, scoped, tag = 'input window, operand 3, single buffered']
    #allocation3 [shape = 's32[1]{0}', space=sflag, size = 0x4, scoped, tag = 'scoped memory for _decoder_forward_impl.2']
    #allocation4 [shape = 'u8[131072]{0}', space=vmem, size = 0x20000, scoped, tag = 'input window, operand 5, single buffered']
    #allocation5 [shape = 's32[1]{0}', space=sflag, size = 0x4, scoped, tag = 'scoped memory for _decoder_forward_impl.2']
    #allocation6 [shape = 'u8[131072]{0}', space=vmem, size = 0x20000, scoped, tag = 'input window, operand 6, single buffered']
    %14 = vsyncpa [#allocation3], 0
    %15 = vsyncpa [#allocation5], 0
    // Predicated region
    $region2: #{_decoder_forward_impl.2} parent=1 // pred_check
      _
    $region3: #{_decoder_forward_impl.2} parent=1 // pred_check_branch
      %17 = sbr.rel (0) target = $region5
    $region4: #{_decoder_forward_impl.2} parent=1 // pred_region
      _
    $region5: #{_decoder_forward_impl.2} parent=1 // pred_fallthru
      _
    // Predicated region
    $region6: #{_decoder_forward_impl.2} parent=1 // pred_check
      _
    $region7: #{_decoder_forward_impl.2} parent=1 // pred_check_branch
      %19 = sbr.rel (0) target = $region9
    $region8: #{_decoder_forward_impl.2} parent=1 // pred_region
      _
    $region9: #{_decoder_forward_impl.2} parent=1 // pred_fallthru
      _
    // Predicated region
    $region10: #{_decoder_forward_impl.2} parent=1 // pred_check
      _
    $region11: #{_decoder_forward_impl.2} parent=1 // pred_check_branch
      %21 = sbr.rel (0) target = $region13
    $region12: #{_decoder_forward_impl.2} parent=1 // pred_region
      _
    $region13: #{_decoder_forward_impl.2} parent=1 // pred_fallthru
      _
    // Predicated region
    $region14: #{_decoder_forward_impl.2} parent=1 // pred_check
      _
    $region15: #{_decoder_forward_impl.2} parent=1 // pred_check_branch
      %23 = sbr.rel (0) target = $region17
    $region16: #{_decoder_forward_impl.2} parent=1 // pred_region
      %s25 = ssub.s32 8192, 8192
      %26 = vsyncadd [#allocation3], %s25
      %s27 = sshll.u32 [#allocation2], 4
      %s28 = int_to_ptr.vmem [resolvable:$true] %s27
      %33 = dma.hbm_to_vmem [thread:$0]  %s3, 8192, %s28, [#allocation3], 256, 256, 16
    $region17: #{_decoder_forward_impl.2} parent=1 // pred_fallthru
      _
    // Predicated region
    $region18: #{_decoder_forward_impl.2} parent=1 // pred_check
      _
    $region19: #{_decoder_forward_impl.2} parent=1 // pred_check_branch
      %35 = sbr.rel (0) target = $region21
    $region20: #{_decoder_forward_impl.2} parent=1 // pred_region
      _
    $region21: #{_decoder_forward_impl.2} parent=1 // pred_fallthru
      _
    // Predicated region
    $region22: #{_decoder_forward_impl.2} parent=1 // pred_check
      _
    $region23: #{_decoder_forward_impl.2} parent=1 // pred_check_branch
      %37 = sbr.rel (0) target = $region25
    $region24: #{_decoder_forward_impl.2} parent=1 // pred_region
      %s39 = ssub.s32 4096, 4096
      %40 = vsyncadd [#allocation5], %s39
      %s41 = sshll.u32 [#allocation4], 4
      %s42 = int_to_ptr.vmem [resolvable:$true] %s41
      %47 = dma.hbm_to_vmem [thread:$0]  %s5, 4096, %s42, [#allocation5], 256, 256, 16
    $region25: #{_decoder_forward_impl.2} parent=1 // pred_fallthru
      _
    // Predicated region
    $region26: #{_decoder_forward_impl.2} parent=1 // pred_check
      _
    $region27: #{_decoder_forward_impl.2} parent=1 // pred_check_branch
      %49 = sbr.rel (0) target = $region29
    $region28: #{_decoder_forward_impl.2} parent=1 // pred_region
      %s51 = ssub.s32 4096, 4096
      %52 = vsyncadd [#allocation5], %s51
      %s53 = sshll.u32 [#allocation6], 4
      %s54 = int_to_ptr.vmem [resolvable:$true] %s53
      %59 = dma.hbm_to_vmem [thread:$0]  %s6, 4096, %s54, [#allocation5], 256, 256, 16
    $region29: #{_decoder_forward_impl.2} parent=1 // pred_fallthru
      _
    // Predicated region
    $region30: #{_decoder_forward_impl.2} parent=1 // pred_check
      _
    $region31: #{_decoder_forward_impl.2} parent=1 // pred_check_branch
      %61 = sbr.rel (0) target = $region33
    $region32: #{_decoder_forward_impl.2} parent=1 // pred_region
      %62 = dma.done [#allocation3], 8192
    $region33: #{_decoder_forward_impl.2} parent=1 // pred_fallthru
      _
    // Predicated region
    $region34: #{_decoder_forward_impl.2} parent=1 // pred_check
      _
    $region35: #{_decoder_forward_impl.2} parent=1 // pred_check_branch
      %64 = sbr.rel (0) target = $region37
    $region36: #{_decoder_forward_impl.2} parent=1 // pred_region
      %65 = dma.done [#allocation5], 4096
    $region37: #{_decoder_forward_impl.2} parent=1 // pred_fallthru
      _
    // Predicated region
    $region38: #{_decoder_forward_impl.2} parent=1 // pred_check
      _
    $region39: #{_decoder_forward_impl.2} parent=1 // pred_check_branch
      %67 = sbr.rel (0) target = $region41
    $region40: #{_decoder_forward_impl.2} parent=1 // pred_region
      %68 = dma.done [#allocation5], 4096
    $region41: #{_decoder_forward_impl.2} parent=1 // pred_fallthru
      _
    %v70 = vld [vmem:[%s1] sm:$0xff]
    %v71 = vld [vmem:[%s1 + $0x8] sm:$0xff]
    %v72 = vpack.c.bf16 %v70, %v70
    %v73 = vpack.c.bf16 %v71, %v71
    %v74 = vld [vmem:[#allocation2] sm:$0xff]
    %v75 = vld [vmem:[#allocation2 + $0x8] sm:$0xff]
    %v76 = vld [vmem:[#allocation2 + $0x10] sm:$0xff]
    %v77 = vld [vmem:[#allocation2 + $0x18] sm:$0xff]
    %v78 = vld [vmem:[#allocation2 + $0x20] sm:$0xff]
    %v79 = vld [vmem:[#allocation2 + $0x28] sm:$0xff]
    %v80 = vld [vmem:[#allocation2 + $0x30] sm:$0xff]
    %v81 = vld [vmem:[#allocation2 + $0x38] sm:$0xff]
    %v82 = vld [vmem:[#allocation2 + $0x40] sm:$0xff]
    %v83 = vld [vmem:[#allocation2 + $0x48] sm:$0xff]
    %v84 = vld [vmem:[#allocation2 + $0x50] sm:$0xff]
    %v85 = vld [vmem:[#allocation2 + $0x58] sm:$0xff]
    %v86 = vld [vmem:[#allocation2 + $0x60] sm:$0xff]
    %v87 = vld [vmem:[#allocation2 + $0x68] sm:$0xff]
    %v88 = vld [vmem:[#allocation2 + $0x70] sm:$0xff]
    %v89 = vld [vmem:[#allocation2 + $0x78] sm:$0xff]
    %v90 = vld [vmem:[#allocation2 + $0x80] sm:$0xff]
    %v91 = vld [vmem:[#allocation2 + $0x88] sm:$0xff]
    %v92 = vld [vmem:[#allocation2 + $0x90] sm:$0xff]
    %v93 = vld [vmem:[#allocation2 + $0x98] sm:$0xff]
    %v94 = vld [vmem:[#allocation2 + $0xa0] sm:$0xff]
    %v95 = vld [vmem:[#allocation2 + $0xa8] sm:$0xff]
    %v96 = vld [vmem:[#allocation2 + $0xb0] sm:$0xff]
    %v97 = vld [vmem:[#allocation2 + $0xb8] sm:$0xff]
    %v98 = vld [vmem:[#allocation2 + $0xc0] sm:$0xff]
    %v99 = vld [vmem:[#allocation2 + $0xc8] sm:$0xff]
    %v100 = vld [vmem:[#allocation2 + $0xd0] sm:$0xff]
    %v101 = vld [vmem:[#allocation2 + $0xd8] sm:$0xff]
    %v102 = vld [vmem:[#allocation2 + $0xe0] sm:$0xff]
    %v103 = vld [vmem:[#allocation2 + $0xe8] sm:$0xff]
    %v104 = vld [vmem:[#allocation2 + $0xf0] sm:$0xff]
    %v105 = vld [vmem:[#allocation2 + $0xf8] sm:$0xff]
    %v106 = vld [vmem:[#allocation2 + $0x100] sm:$0xff]
    %v107 = vld [vmem:[#allocation2 + $0x108] sm:$0xff]
    %v108 = vld [vmem:[#allocation2 + $0x110] sm:$0xff]
    %v109 = vld [vmem:[#allocation2 + $0x118] sm:$0xff]
    %v110 = vld [vmem:[#allocation2 + $0x120] sm:$0xff]
    %v111 = vld [vmem:[#allocation2 + $0x128] sm:$0xff]
    %v112 = vld [vmem:[#allocation2 + $0x130] sm:$0xff]
    %v113 = vld [vmem:[#allocation2 + $0x138] sm:$0xff]
    %v114 = vld [vmem:[#allocation2 + $0x140] sm:$0xff]
    %v115 = vld [vmem:[#allocation2 + $0x148] sm:$0xff]
    %v116 = vld [vmem:[#allocation2 + $0x150] sm:$0xff]
    %v117 = vld [vmem:[#allocation2 + $0x158] sm:$0xff]
    %v118 = vld [vmem:[#allocation2 + $0x160] sm:$0xff]
    %v119 = vld [vmem:[#allocation2 + $0x168] sm:$0xff]
    %v120 = vld [vmem:[#allocation2 + $0x170] sm:$0xff]
    %v121 = vld [vmem:[#allocation2 + $0x178] sm:$0xff]
    %v122 = vld [vmem:[#allocation2 + $0x180] sm:$0xff]
    %v123 = vld [vmem:[#allocation2 + $0x188] sm:$0xff]
    %v124 = vld [vmem:[#allocation2 + $0x190] sm:$0xff]
    %v125 = vld [vmem:[#allocation2 + $0x198] sm:$0xff]
    %v126 = vld [vmem:[#allocation2 + $0x1a0] sm:$0xff]
    %v127 = vld [vmem:[#allocation2 + $0x1a8] sm:$0xff]
    %v128 = vld [vmem:[#allocation2 + $0x1b0] sm:$0xff]
    %v129 = vld [vmem:[#allocation2 + $0x1b8] sm:$0xff]
    %v130 = vld [vmem:[#allocation2 + $0x1c0] sm:$0xff]
    %v131 = vld [vmem:[#allocation2 + $0x1c8] sm:$0xff]
    %v132 = vld [vmem:[#allocation2 + $0x1d0] sm:$0xff]
    %v133 = vld [vmem:[#allocation2 + $0x1d8] sm:$0xff]
    %v134 = vld [vmem:[#allocation2 + $0x1e0] sm:$0xff]
    %v135 = vld [vmem:[#allocation2 + $0x1e8] sm:$0xff]
    %v136 = vld [vmem:[#allocation2 + $0x1f0] sm:$0xff]
    %v137 = vld [vmem:[#allocation2 + $0x1f8] sm:$0xff]
    %v138 = vld [vmem:[%s4] sm:$0xf]
    %v139 = vld [vmem:[%s4 + $0x4] sm:$0xf]
    %v142 = vlaneseq
    %v143 = vshrl.u32 %v142, 7
    %v144 = vsub.s32 0, %v143
    %v145 = vrot.slane %v138, %v144
    %v146 = vlaneseq
    %v147 = vshrl.u32 %v146, 7
    %v148 = vsub.s32 1, %v147
    %v149 = vrot.slane %v138, %v148
    %v150 = vlaneseq
    %v151 = vshrl.u32 %v150, 7
    %v152 = vsub.s32 2, %v151
    %v153 = vrot.slane %v138, %v152
    %v154 = vlaneseq
    %v155 = vshrl.u32 %v154, 7
    %v156 = vsub.s32 3, %v155
    %v157 = vrot.slane %v138, %v156
    %v158 = vlaneseq
    %v159 = vshrl.u32 %v158, 7
    %v160 = vsub.s32 0, %v159
    %v161 = vrot.slane %v139, %v160
    %v162 = vlaneseq
    %v163 = vshrl.u32 %v162, 7
    %v164 = vsub.s32 1, %v163
    %v165 = vrot.slane %v139, %v164
    %v166 = vlaneseq
    %v167 = vshrl.u32 %v166, 7
    %v168 = vsub.s32 2, %v167
    %v169 = vrot.slane %v139, %v168
    %v170 = vlaneseq
    %v171 = vshrl.u32 %v170, 7
    %v172 = vsub.s32 3, %v171
    %v173 = vrot.slane %v139, %v172
    %v214 = vunpack.c.l.b16 %v74
    %v215 = vunpack.c.h.b16 %v74
    %v216 = vunpack.c.l.b16 %v75
    %v217 = vunpack.c.h.b16 %v75
    %v218 = vunpack.c.l.b16 %v76
    %v219 = vunpack.c.h.b16 %v76
    %v220 = vunpack.c.l.b16 %v77
    %v221 = vunpack.c.h.b16 %v77
    %v222 = vunpack.c.l.b16 %v78
    %v223 = vunpack.c.h.b16 %v78
    %v224 = vunpack.c.l.b16 %v79
    %v225 = vunpack.c.h.b16 %v79
    %v226 = vunpack.c.l.b16 %v80
    %v227 = vunpack.c.h.b16 %v80
    %v228 = vunpack.c.l.b16 %v81
    %v229 = vunpack.c.h.b16 %v81
    %v230 = vunpack.c.l.b16 %v82
    %v231 = vunpack.c.h.b16 %v82
    %v232 = vunpack.c.l.b16 %v83
    %v233 = vunpack.c.h.b16 %v83
    %v234 = vunpack.c.l.b16 %v84
    %v235 = vunpack.c.h.b16 %v84
    %v236 = vunpack.c.l.b16 %v85
    %v237 = vunpack.c.h.b16 %v85
    %v238 = vunpack.c.l.b16 %v86
    %v239 = vunpack.c.h.b16 %v86
    %v240 = vunpack.c.l.b16 %v87
    %v241 = vunpack.c.h.b16 %v87
    %v242 = vunpack.c.l.b16 %v88
    %v243 = vunpack.c.h.b16 %v88
    %v244 = vunpack.c.l.b16 %v89
    %v245 = vunpack.c.h.b16 %v89
    %v246 = vunpack.c.l.b16 %v90
    %v247 = vunpack.c.h.b16 %v90
    %v248 = vunpack.c.l.b16 %v91
    %v249 = vunpack.c.h.b16 %v91
    %v250 = vunpack.c.l.b16 %v92
    %v251 = vunpack.c.h.b16 %v92
    %v252 = vunpack.c.l.b16 %v93
    %v253 = vunpack.c.h.b16 %v93
    %v254 = vunpack.c.l.b16 %v94
    %v255 = vunpack.c.h.b16 %v94
    %v256 = vunpack.c.l.b16 %v95
    %v257 = vunpack.c.h.b16 %v95
    %v258 = vunpack.c.l.b16 %v96
    %v259 = vunpack.c.h.b16 %v96
    %v260 = vunpack.c.l.b16 %v97
    %v261 = vunpack.c.h.b16 %v97
    %v262 = vunpack.c.l.b16 %v98
    %v263 = vunpack.c.h.b16 %v98
    %v264 = vunpack.c.l.b16 %v99
    %v265 = vunpack.c.h.b16 %v99
    %v266 = vunpack.c.l.b16 %v100
    %v267 = vunpack.c.h.b16 %v100
    %v268 = vunpack.c.l.b16 %v101
    %v269 = vunpack.c.h.b16 %v101
    %v270 = vunpack.c.l.b16 %v102
    %v271 = vunpack.c.h.b16 %v102
    %v272 = vunpack.c.l.b16 %v103
    %v273 = vunpack.c.h.b16 %v103
    %v274 = vunpack.c.l.b16 %v104
    %v275 = vunpack.c.h.b16 %v104
    %v276 = vunpack.c.l.b16 %v105
    %v277 = vunpack.c.h.b16 %v105
    %v278 = vpack.c.b16 %v218, %v214
    %v279 = vpack.c.b16 %v219, %v215
    %v280 = vpack.c.b16 %v220, %v216
    %v281 = vpack.c.b16 %v221, %v217
    %v282 = vpack.c.b16 %v226, %v222
    %v283 = vpack.c.b16 %v227, %v223
    %v284 = vpack.c.b16 %v228, %v224
    %v285 = vpack.c.b16 %v229, %v225
    %v286 = vpack.c.b16 %v234, %v230
    %v287 = vpack.c.b16 %v235, %v231
    %v288 = vpack.c.b16 %v236, %v232
    %v289 = vpack.c.b16 %v237, %v233
    %v290 = vpack.c.b16 %v242, %v238
    %v291 = vpack.c.b16 %v243, %v239
    %v292 = vpack.c.b16 %v244, %v240
    %v293 = vpack.c.b16 %v245, %v241
    %v294 = vpack.c.b16 %v250, %v246
    %v295 = vpack.c.b16 %v251, %v247
    %v296 = vpack.c.b16 %v252, %v248
    %v297 = vpack.c.b16 %v253, %v249
    %v298 = vpack.c.b16 %v258, %v254
    %v299 = vpack.c.b16 %v259, %v255
    %v300 = vpack.c.b16 %v260, %v256
    %v301 = vpack.c.b16 %v261, %v257
    %v302 = vpack.c.b16 %v266, %v262
    %v303 = vpack.c.b16 %v267, %v263
    %v304 = vpack.c.b16 %v268, %v264
    %v305 = vpack.c.b16 %v269, %v265
    %v306 = vpack.c.b16 %v274, %v270
    %v307 = vpack.c.b16 %v275, %v271
    %v308 = vpack.c.b16 %v276, %v272
    %v309 = vpack.c.b16 %v277, %v273
    %342 = vmatprep.subr.bf16.mxu0 %v307
    %343 = vmatpush1.bf16.msra.mxu0 %v306
    %344 = vmatprep.subr.bf16.mxu0 %v303
    %345 = vmatpush1.bf16.msra.mxu0 %v302
    %346 = vmatprep.subr.bf16.mxu0 %v299
    %347 = vmatpush1.bf16.msra.mxu0 %v298
    %348 = vmatprep.subr.bf16.mxu0 %v295
    %349 = vmatpush1.bf16.msra.mxu0 %v294
    %350 = vmatprep.subr.bf16.mxu0 %v291
    %351 = vmatpush1.bf16.msra.mxu0 %v290
    %352 = vmatprep.subr.bf16.mxu0 %v287
    %353 = vmatpush1.bf16.msra.mxu0 %v286
    %354 = vmatprep.subr.bf16.mxu0 %v283
    %355 = vmatpush1.bf16.msra.mxu0 %v282
    %356 = vmatprep.subr.bf16.mxu0 %v279
    %357 = vmatpush1.bf16.msra.mxu0 %v278
    %358 = vmatprep.subr.bf16.mxu0 0
    %359 = vmatpush2.bf16.msra.mxu0 0
    %360 = vmatprep.subr.bf16.mxu0 0
    %361 = vmatpush2.bf16.msra.mxu0 0
    %362 = vmatprep.subr.bf16.mxu0 0
    %363 = vmatpush2.bf16.msra.mxu0 0
    %364 = vmatprep.subr.bf16.mxu0 0
    %365 = vmatpush2.bf16.msra.mxu0 0
    %366 = vmatprep.subr.bf16.mxu0 0
    %367 = vmatpush2.bf16.msra.mxu0 0
    %368 = vmatprep.subr.bf16.mxu0 0
    %369 = vmatpush2.bf16.msra.mxu0 0
    %370 = vmatprep.subr.bf16.mxu0 0
    %371 = vmatpush2.bf16.msra.mxu0 0
    %372 = vmatprep.subr.bf16.mxu0 0
    %373 = vmatpush2.bf16.msra.mxu0 0
    %374 = vmatprep.mubr.bf16.mxu0 0
    %375 = vmatmul.mubr.bf16.gmra.mxu0 %v72
    %v376 = vpop.f32.mrf.mxu0
    %v377 = vadd.f32 %v145, %v376
    %v378 = vpop.f32.mrf.mxu0
    %v379 = vadd.f32 %v149, %v378
    %v380 = vpop.f32.mrf.mxu0
    %v381 = vpop.f32.mrf.mxu0
    %382 = vdwg.mxu0
    %383 = vmatprep.subr.bf16.mxu0 %v309
    %384 = vmatpush1.bf16.msra.mxu0 %v308
    %385 = vmatprep.subr.bf16.mxu0 %v305
    %386 = vmatpush1.bf16.msra.mxu0 %v304
    %387 = vmatprep.subr.bf16.mxu0 %v301
    %388 = vmatpush1.bf16.msra.mxu0 %v300
    %389 = vmatprep.subr.bf16.mxu0 %v297
    %390 = vmatpush1.bf16.msra.mxu0 %v296
    %391 = vmatprep.subr.bf16.mxu0 %v293
    %392 = vmatpush1.bf16.msra.mxu0 %v292
    %393 = vmatprep.subr.bf16.mxu0 %v289
    %394 = vmatpush1.bf16.msra.mxu0 %v288
    %395 = vmatprep.subr.bf16.mxu0 %v285
    %396 = vmatpush1.bf16.msra.mxu0 %v284
    %397 = vmatprep.subr.bf16.mxu0 %v281
    %398 = vmatpush1.bf16.msra.mxu0 %v280
    %399 = vmatprep.subr.bf16.mxu0 0
    %400 = vmatpush2.bf16.msra.mxu0 0
    %401 = vmatprep.subr.bf16.mxu0 0
    %402 = vmatpush2.bf16.msra.mxu0 0
    %403 = vmatprep.subr.bf16.mxu0 0
    %404 = vmatpush2.bf16.msra.mxu0 0
    %405 = vmatprep.subr.bf16.mxu0 0
    %406 = vmatpush2.bf16.msra.mxu0 0
    %407 = vmatprep.subr.bf16.mxu0 0
    %408 = vmatpush2.bf16.msra.mxu0 0
    %409 = vmatprep.subr.bf16.mxu0 0
    %410 = vmatpush2.bf16.msra.mxu0 0
    %411 = vmatprep.subr.bf16.mxu0 0
    %412 = vmatpush2.bf16.msra.mxu0 0
    %413 = vmatprep.subr.bf16.mxu0 0
    %414 = vmatpush2.bf16.msra.mxu0 0
    %415 = vmatprep.mubr.bf16.mxu0 0
    %416 = vmatmul.mubr.bf16.gmra.mxu0 %v72
    %v417 = vpop.f32.mrf.mxu0
    %v418 = vadd.f32 %v153, %v417
    %v419 = vpop.f32.mrf.mxu0
    %v420 = vadd.f32 %v157, %v419
    %v421 = vpop.f32.mrf.mxu0
    %v422 = vpop.f32.mrf.mxu0
    %423 = vdwg.mxu0
    %v456 = vunpack.c.l.b16 %v106
    %v457 = vunpack.c.h.b16 %v106
    %v458 = vunpack.c.l.b16 %v107
    %v459 = vunpack.c.h.b16 %v107
    %v460 = vunpack.c.l.b16 %v108
    %v461 = vunpack.c.h.b16 %v108
    %v462 = vunpack.c.l.b16 %v109
    %v463 = vunpack.c.h.b16 %v109
    %v464 = vunpack.c.l.b16 %v110
    %v465 = vunpack.c.h.b16 %v110
    %v466 = vunpack.c.l.b16 %v111
    %v467 = vunpack.c.h.b16 %v111
    %v468 = vunpack.c.l.b16 %v112
    %v469 = vunpack.c.h.b16 %v112
    %v470 = vunpack.c.l.b16 %v113
    %v471 = vunpack.c.h.b16 %v113
    %v472 = vunpack.c.l.b16 %v114
    %v473 = vunpack.c.h.b16 %v114
    %v474 = vunpack.c.l.b16 %v115
    %v475 = vunpack.c.h.b16 %v115
    %v476 = vunpack.c.l.b16 %v116
    %v477 = vunpack.c.h.b16 %v116
    %v478 = vunpack.c.l.b16 %v117
    %v479 = vunpack.c.h.b16 %v117
    %v480 = vunpack.c.l.b16 %v118
    %v481 = vunpack.c.h.b16 %v118
    %v482 = vunpack.c.l.b16 %v119
    %v483 = vunpack.c.h.b16 %v119
    %v484 = vunpack.c.l.b16 %v120
    %v485 = vunpack.c.h.b16 %v120
    %v486 = vunpack.c.l.b16 %v121
    %v487 = vunpack.c.h.b16 %v121
    %v488 = vunpack.c.l.b16 %v122
    %v489 = vunpack.c.h.b16 %v122
    %v490 = vunpack.c.l.b16 %v123
    %v491 = vunpack.c.h.b16 %v123
    %v492 = vunpack.c.l.b16 %v124
    %v493 = vunpack.c.h.b16 %v124
    %v494 = vunpack.c.l.b16 %v125
    %v495 = vunpack.c.h.b16 %v125
    %v496 = vunpack.c.l.b16 %v126
    %v497 = vunpack.c.h.b16 %v126
    %v498 = vunpack.c.l.b16 %v127
    %v499 = vunpack.c.h.b16 %v127
    %v500 = vunpack.c.l.b16 %v128
    %v501 = vunpack.c.h.b16 %v128
    %v502 = vunpack.c.l.b16 %v129
    %v503 = vunpack.c.h.b16 %v129
    %v504 = vunpack.c.l.b16 %v130
    %v505 = vunpack.c.h.b16 %v130
    %v506 = vunpack.c.l.b16 %v131
    %v507 = vunpack.c.h.b16 %v131
    %v508 = vunpack.c.l.b16 %v132
    %v509 = vunpack.c.h.b16 %v132
    %v510 = vunpack.c.l.b16 %v133
    %v511 = vunpack.c.h.b16 %v133
    %v512 = vunpack.c.l.b16 %v134
    %v513 = vunpack.c.h.b16 %v134
    %v514 = vunpack.c.l.b16 %v135
    %v515 = vunpack.c.h.b16 %v135
    %v516 = vunpack.c.l.b16 %v136
    %v517 = vunpack.c.h.b16 %v136
    %v518 = vunpack.c.l.b16 %v137
    %v519 = vunpack.c.h.b16 %v137
    %v520 = vpack.c.b16 %v460, %v456
    %v521 = vpack.c.b16 %v461, %v457
    %v522 = vpack.c.b16 %v462, %v458
    %v523 = vpack.c.b16 %v463, %v459
    %v524 = vpack.c.b16 %v468, %v464
    %v525 = vpack.c.b16 %v469, %v465
    %v526 = vpack.c.b16 %v470, %v466
    %v527 = vpack.c.b16 %v471, %v467
    %v528 = vpack.c.b16 %v476, %v472
    %v529 = vpack.c.b16 %v477, %v473
    %v530 = vpack.c.b16 %v478, %v474
    %v531 = vpack.c.b16 %v479, %v475
    %v532 = vpack.c.b16 %v484, %v480
    %v533 = vpack.c.b16 %v485, %v481
    %v534 = vpack.c.b16 %v486, %v482
    %v535 = vpack.c.b16 %v487, %v483
    %v536 = vpack.c.b16 %v492, %v488
    %v537 = vpack.c.b16 %v493, %v489
    %v538 = vpack.c.b16 %v494, %v490
    %v539 = vpack.c.b16 %v495, %v491
    %v540 = vpack.c.b16 %v500, %v496
    %v541 = vpack.c.b16 %v501, %v497
    %v542 = vpack.c.b16 %v502, %v498
    %v543 = vpack.c.b16 %v503, %v499
    %v544 = vpack.c.b16 %v508, %v504
    %v545 = vpack.c.b16 %v509, %v505
    %v546 = vpack.c.b16 %v510, %v506
    %v547 = vpack.c.b16 %v511, %v507
    %v548 = vpack.c.b16 %v516, %v512
    %v549 = vpack.c.b16 %v517, %v513
    %v550 = vpack.c.b16 %v518, %v514
    %v551 = vpack.c.b16 %v519, %v515
    %584 = vmatprep.subr.bf16.mxu0 %v549
    %585 = vmatpush1.bf16.msra.mxu0 %v548
    %586 = vmatprep.subr.bf16.mxu0 %v545
    %587 = vmatpush1.bf16.msra.mxu0 %v544
    %588 = vmatprep.subr.bf16.mxu0 %v541
    %589 = vmatpush1.bf16.msra.mxu0 %v540
    %590 = vmatprep.subr.bf16.mxu0 %v537
    %591 = vmatpush1.bf16.msra.mxu0 %v536
    %592 = vmatprep.subr.bf16.mxu0 %v533
    %593 = vmatpush1.bf16.msra.mxu0 %v532
    %594 = vmatprep.subr.bf16.mxu0 %v529
    %595 = vmatpush1.bf16.msra.mxu0 %v528
    %596 = vmatprep.subr.bf16.mxu0 %v525
    %597 = vmatpush1.bf16.msra.mxu0 %v524
    %598 = vmatprep.subr.bf16.mxu0 %v521
    %599 = vmatpush1.bf16.msra.mxu0 %v520
    %600 = vmatprep.subr.bf16.mxu0 0
    %601 = vmatpush2.bf16.msra.mxu0 0
    %602 = vmatprep.subr.bf16.mxu0 0
    %603 = vmatpush2.bf16.msra.mxu0 0
    %604 = vmatprep.subr.bf16.mxu0 0
    %605 = vmatpush2.bf16.msra.mxu0 0
    %606 = vmatprep.subr.bf16.mxu0 0
    %607 = vmatpush2.bf16.msra.mxu0 0
    %608 = vmatprep.subr.bf16.mxu0 0
    %609 = vmatpush2.bf16.msra.mxu0 0
    %610 = vmatprep.subr.bf16.mxu0 0
    %611 = vmatpush2.bf16.msra.mxu0 0
    %612 = vmatprep.subr.bf16.mxu0 0
    %613 = vmatpush2.bf16.msra.mxu0 0
    %614 = vmatprep.subr.bf16.mxu0 0
    %615 = vmatpush2.bf16.msra.mxu0 0
    %616 = vmatprep.mubr.bf16.mxu0 0
    %617 = vmatmul.mubr.bf16.gmra.mxu0 %v73
    %v618 = vpop.f32.mrf.mxu0
    %v619 = vadd.f32 %v161, %v618
    %v620 = vpop.f32.mrf.mxu0
    %v621 = vadd.f32 %v165, %v620
    %v622 = vpop.f32.mrf.mxu0
    %v623 = vpop.f32.mrf.mxu0
    %624 = vdwg.mxu0
    %625 = vmatprep.subr.bf16.mxu0 %v551
    %626 = vmatpush1.bf16.msra.mxu0 %v550
    %627 = vmatprep.subr.bf16.mxu0 %v547
    %628 = vmatpush1.bf16.msra.mxu0 %v546
    %629 = vmatprep.subr.bf16.mxu0 %v543
    %630 = vmatpush1.bf16.msra.mxu0 %v542
    %631 = vmatprep.subr.bf16.mxu0 %v539
    %632 = vmatpush1.bf16.msra.mxu0 %v538
    %633 = vmatprep.subr.bf16.mxu0 %v535
    %634 = vmatpush1.bf16.msra.mxu0 %v534
    %635 = vmatprep.subr.bf16.mxu0 %v531
    %636 = vmatpush1.bf16.msra.mxu0 %v530
    %637 = vmatprep.subr.bf16.mxu0 %v527
    %638 = vmatpush1.bf16.msra.mxu0 %v526
    %639 = vmatprep.subr.bf16.mxu0 %v523
    %640 = vmatpush1.bf16.msra.mxu0 %v522
    %641 = vmatprep.subr.bf16.mxu0 0
    %642 = vmatpush2.bf16.msra.mxu0 0
    %643 = vmatprep.subr.bf16.mxu0 0
    %644 = vmatpush2.bf16.msra.mxu0 0
    %645 = vmatprep.subr.bf16.mxu0 0
    %646 = vmatpush2.bf16.msra.mxu0 0
    %647 = vmatprep.subr.bf16.mxu0 0
    %648 = vmatpush2.bf16.msra.mxu0 0
    %649 = vmatprep.subr.bf16.mxu0 0
    %650 = vmatpush2.bf16.msra.mxu0 0
    %651 = vmatprep.subr.bf16.mxu0 0
    %652 = vmatpush2.bf16.msra.mxu0 0
    %653 = vmatprep.subr.bf16.mxu0 0
    %654 = vmatpush2.bf16.msra.mxu0 0
    %655 = vmatprep.subr.bf16.mxu0 0
    %656 = vmatpush2.bf16.msra.mxu0 0
    %657 = vmatprep.mubr.bf16.mxu0 0
    %658 = vmatmul.mubr.bf16.gmra.mxu0 %v73
    %v659 = vpop.f32.mrf.mxu0
    %v660 = vadd.f32 %v169, %v659
    %v661 = vpop.f32.mrf.mxu0
    %v662 = vadd.f32 %v173, %v661
    %v663 = vpop.f32.mrf.mxu0
    %v664 = vpop.f32.mrf.mxu0
    %665 = vdwg.mxu0
    %v666 = vld [vmem:[%s0] sm:$0xf]
    %v667 = vld [vmem:[#allocation4] sm:$0xff]
    %v668 = vld [vmem:[#allocation4 + $0x8] sm:$0xff]
    %v669 = vld [vmem:[#allocation4 + $0x10] sm:$0xff]
    %v670 = vld [vmem:[#allocation4 + $0x18] sm:$0xff]
    %v671 = vld [vmem:[#allocation4 + $0x20] sm:$0xff]
    %v672 = vld [vmem:[#allocation4 + $0x28] sm:$0xff]
    %v673 = vld [vmem:[#allocation4 + $0x30] sm:$0xff]
    %v674 = vld [vmem:[#allocation4 + $0x38] sm:$0xff]
    %v675 = vld [vmem:[#allocation4 + $0x40] sm:$0xff]
    %v676 = vld [vmem:[#allocation4 + $0x48] sm:$0xff]
    %v677 = vld [vmem:[#allocation4 + $0x50] sm:$0xff]
    %v678 = vld [vmem:[#allocation4 + $0x58] sm:$0xff]
    %v679 = vld [vmem:[#allocation4 + $0x60] sm:$0xff]
    %v680 = vld [vmem:[#allocation4 + $0x68] sm:$0xff]
    %v681 = vld [vmem:[#allocation4 + $0x70] sm:$0xff]
    %v682 = vld [vmem:[#allocation4 + $0x78] sm:$0xff]
    %v683 = vld [vmem:[#allocation4 + $0x80] sm:$0xff]
    %v684 = vld [vmem:[#allocation4 + $0x88] sm:$0xff]
    %v685 = vld [vmem:[#allocation4 + $0x90] sm:$0xff]
    %v686 = vld [vmem:[#allocation4 + $0x98] sm:$0xff]
    %v687 = vld [vmem:[#allocation4 + $0xa0] sm:$0xff]
    %v688 = vld [vmem:[#allocation4 + $0xa8] sm:$0xff]
    %v689 = vld [vmem:[#allocation4 + $0xb0] sm:$0xff]
    %v690 = vld [vmem:[#allocation4 + $0xb8] sm:$0xff]
    %v691 = vld [vmem:[#allocation4 + $0xc0] sm:$0xff]
    %v692 = vld [vmem:[#allocation4 + $0xc8] sm:$0xff]
    %v693 = vld [vmem:[#allocation4 + $0xd0] sm:$0xff]
    %v694 = vld [vmem:[#allocation4 + $0xd8] sm:$0xff]
    %v695 = vld [vmem:[#allocation4 + $0xe0] sm:$0xff]
    %v696 = vld [vmem:[#allocation4 + $0xe8] sm:$0xff]
    %v697 = vld [vmem:[#allocation4 + $0xf0] sm:$0xff]
    %v698 = vld [vmem:[#allocation4 + $0xf8] sm:$0xff]
    %v731 = vunpack.c.l.b16 %v667
    %v732 = vunpack.c.h.b16 %v667
    %v733 = vunpack.c.l.b16 %v668
    %v734 = vunpack.c.h.b16 %v668
    %v735 = vunpack.c.l.b16 %v669
    %v736 = vunpack.c.h.b16 %v669
    %v737 = vunpack.c.l.b16 %v670
    %v738 = vunpack.c.h.b16 %v670
    %v739 = vunpack.c.l.b16 %v671
    %v740 = vunpack.c.h.b16 %v671
    %v741 = vunpack.c.l.b16 %v672
    %v742 = vunpack.c.h.b16 %v672
    %v743 = vunpack.c.l.b16 %v673
    %v744 = vunpack.c.h.b16 %v673
    %v745 = vunpack.c.l.b16 %v674
    %v746 = vunpack.c.h.b16 %v674
    %v747 = vunpack.c.l.b16 %v675
    %v748 = vunpack.c.h.b16 %v675
    %v749 = vunpack.c.l.b16 %v676
    %v750 = vunpack.c.h.b16 %v676
    %v751 = vunpack.c.l.b16 %v677
    %v752 = vunpack.c.h.b16 %v677
    %v753 = vunpack.c.l.b16 %v678
    %v754 = vunpack.c.h.b16 %v678
    %v755 = vunpack.c.l.b16 %v679
    %v756 = vunpack.c.h.b16 %v679
    %v757 = vunpack.c.l.b16 %v680
    %v758 = vunpack.c.h.b16 %v680
    %v759 = vunpack.c.l.b16 %v681
    %v760 = vunpack.c.h.b16 %v681
    %v761 = vunpack.c.l.b16 %v682
    %v762 = vunpack.c.h.b16 %v682
    %v763 = vunpack.c.l.b16 %v683
    %v764 = vunpack.c.h.b16 %v683
    %v765 = vunpack.c.l.b16 %v684
    %v766 = vunpack.c.h.b16 %v684
    %v767 = vunpack.c.l.b16 %v685
    %v768 = vunpack.c.h.b16 %v685
    %v769 = vunpack.c.l.b16 %v686
    %v770 = vunpack.c.h.b16 %v686
    %v771 = vunpack.c.l.b16 %v687
    %v772 = vunpack.c.h.b16 %v687
    %v773 = vunpack.c.l.b16 %v688
    %v774 = vunpack.c.h.b16 %v688
    %v775 = vunpack.c.l.b16 %v689
    %v776 = vunpack.c.h.b16 %v689
    %v777 = vunpack.c.l.b16 %v690
    %v778 = vunpack.c.h.b16 %v690
    %v779 = vunpack.c.l.b16 %v691
    %v780 = vunpack.c.h.b16 %v691
    %v781 = vunpack.c.l.b16 %v692
    %v782 = vunpack.c.h.b16 %v692
    %v783 = vunpack.c.l.b16 %v693
    %v784 = vunpack.c.h.b16 %v693
    %v785 = vunpack.c.l.b16 %v694
    %v786 = vunpack.c.h.b16 %v694
    %v787 = vunpack.c.l.b16 %v695
    %v788 = vunpack.c.h.b16 %v695
    %v789 = vunpack.c.l.b16 %v696
    %v790 = vunpack.c.h.b16 %v696
    %v791 = vunpack.c.l.b16 %v697
    %v792 = vunpack.c.h.b16 %v697
    %v793 = vunpack.c.l.b16 %v698
    %v794 = vunpack.c.h.b16 %v698
    %v795 = vpack.c.b16 %v735, %v731
    %v796 = vpack.c.b16 %v736, %v732
    %v797 = vpack.c.b16 %v737, %v733
    %v798 = vpack.c.b16 %v738, %v734
    %v799 = vpack.c.b16 %v743, %v739
    %v800 = vpack.c.b16 %v744, %v740
    %v801 = vpack.c.b16 %v745, %v741
    %v802 = vpack.c.b16 %v746, %v742
    %v803 = vpack.c.b16 %v751, %v747
    %v804 = vpack.c.b16 %v752, %v748
    %v805 = vpack.c.b16 %v753, %v749
    %v806 = vpack.c.b16 %v754, %v750
    %v807 = vpack.c.b16 %v759, %v755
    %v808 = vpack.c.b16 %v760, %v756
    %v809 = vpack.c.b16 %v761, %v757
    %v810 = vpack.c.b16 %v762, %v758
    %v811 = vpack.c.b16 %v767, %v763
    %v812 = vpack.c.b16 %v768, %v764
    %v813 = vpack.c.b16 %v769, %v765
    %v814 = vpack.c.b16 %v770, %v766
    %v815 = vpack.c.b16 %v775, %v771
    %v816 = vpack.c.b16 %v776, %v772
    %v817 = vpack.c.b16 %v777, %v773
    %v818 = vpack.c.b16 %v778, %v774
    %v819 = vpack.c.b16 %v783, %v779
    %v820 = vpack.c.b16 %v784, %v780
    %v821 = vpack.c.b16 %v785, %v781
    %v822 = vpack.c.b16 %v786, %v782
    %v823 = vpack.c.b16 %v791, %v787
    %v824 = vpack.c.b16 %v792, %v788
    %v825 = vpack.c.b16 %v793, %v789
    %v826 = vpack.c.b16 %v794, %v790
    %859 = vmatprep.subr.bf16.mxu0 %v824
    %860 = vmatpush1.bf16.msra.mxu0 %v823
    %861 = vmatprep.subr.bf16.mxu0 %v820
    %862 = vmatpush1.bf16.msra.mxu0 %v819
    %863 = vmatprep.subr.bf16.mxu0 %v816
    %864 = vmatpush1.bf16.msra.mxu0 %v815
    %865 = vmatprep.subr.bf16.mxu0 %v812
    %866 = vmatpush1.bf16.msra.mxu0 %v811
    %867 = vmatprep.subr.bf16.mxu0 %v808
    %868 = vmatpush1.bf16.msra.mxu0 %v807
    %869 = vmatprep.subr.bf16.mxu0 %v804
    %870 = vmatpush1.bf16.msra.mxu0 %v803
    %871 = vmatprep.subr.bf16.mxu0 %v800
    %872 = vmatpush1.bf16.msra.mxu0 %v799
    %873 = vmatprep.subr.bf16.mxu0 %v796
    %874 = vmatpush1.bf16.msra.mxu0 %v795
    %875 = vmatprep.subr.bf16.mxu0 0
    %876 = vmatpush2.bf16.msra.mxu0 0
    %877 = vmatprep.subr.bf16.mxu0 0
    %878 = vmatpush2.bf16.msra.mxu0 0
    %879 = vmatprep.subr.bf16.mxu0 0
    %880 = vmatpush2.bf16.msra.mxu0 0
    %881 = vmatprep.subr.bf16.mxu0 0
    %882 = vmatpush2.bf16.msra.mxu0 0
    %883 = vmatprep.subr.bf16.mxu0 0
    %884 = vmatpush2.bf16.msra.mxu0 0
    %885 = vmatprep.subr.bf16.mxu0 0
    %886 = vmatpush2.bf16.msra.mxu0 0
    %887 = vmatprep.subr.bf16.mxu0 0
    %888 = vmatpush2.bf16.msra.mxu0 0
    %889 = vmatprep.subr.bf16.mxu0 0
    %890 = vmatpush2.bf16.msra.mxu0 0
    %891 = vmatprep.mubr.bf16.mxu0 0
    %892 = vmatmul.mubr.bf16.gmra.mxu0 %v666
    %v893 = vpop.f32.mrf.mxu0
    %v894 = vadd.f32 %v377, %v893
    %v895 = vpop.f32.mrf.mxu0
    %v896 = vadd.f32 %v379, %v895
    %v897 = vpop.f32.mrf.mxu0
    %v898 = vpop.f32.mrf.mxu0
    %899 = vdwg.mxu0
    %900 = vmatprep.subr.bf16.mxu0 %v826
    %901 = vmatpush1.bf16.msra.mxu0 %v825
    %902 = vmatprep.subr.bf16.mxu0 %v822
    %903 = vmatpush1.bf16.msra.mxu0 %v821
    %904 = vmatprep.subr.bf16.mxu0 %v818
    %905 = vmatpush1.bf16.msra.mxu0 %v817
    %906 = vmatprep.subr.bf16.mxu0 %v814
    %907 = vmatpush1.bf16.msra.mxu0 %v813
    %908 = vmatprep.subr.bf16.mxu0 %v810
    %909 = vmatpush1.bf16.msra.mxu0 %v809
    %910 = vmatprep.subr.bf16.mxu0 %v806
    %911 = vmatpush1.bf16.msra.mxu0 %v805
    %912 = vmatprep.subr.bf16.mxu0 %v802
    %913 = vmatpush1.bf16.msra.mxu0 %v801
    %914 = vmatprep.subr.bf16.mxu0 %v798
    %915 = vmatpush1.bf16.msra.mxu0 %v797
    %916 = vmatprep.subr.bf16.mxu0 0
    %917 = vmatpush2.bf16.msra.mxu0 0
    %918 = vmatprep.subr.bf16.mxu0 0
    %919 = vmatpush2.bf16.msra.mxu0 0
    %920 = vmatprep.subr.bf16.mxu0 0
    %921 = vmatpush2.bf16.msra.mxu0 0
    %922 = vmatprep.subr.bf16.mxu0 0
    %923 = vmatpush2.bf16.msra.mxu0 0
    %924 = vmatprep.subr.bf16.mxu0 0
    %925 = vmatpush2.bf16.msra.mxu0 0
    %926 = vmatprep.subr.bf16.mxu0 0
    %927 = vmatpush2.bf16.msra.mxu0 0
    %928 = vmatprep.subr.bf16.mxu0 0
    %929 = vmatpush2.bf16.msra.mxu0 0
    %930 = vmatprep.subr.bf16.mxu0 0
    %931 = vmatpush2.bf16.msra.mxu0 0
    %932 = vmatprep.mubr.bf16.mxu0 0
    %933 = vmatmul.mubr.bf16.gmra.mxu0 %v666
    %v934 = vpop.f32.mrf.mxu0
    %v935 = vadd.f32 %v418, %v934
    %v936 = vpop.f32.mrf.mxu0
    %v937 = vadd.f32 %v420, %v936
    %v938 = vpop.f32.mrf.mxu0
    %v939 = vpop.f32.mrf.mxu0
    %940 = vdwg.mxu0
    %v941 = vxor.u32 %v894, 2147483648
    %v942 = vmul.f32 %v941, 1.442695
    %v943 = vpow.pop %v942
    %v944 = vadd.f32 %v943, 1.0
    %v945 = vrcp.pop %v944
    %v946 = vmul.f32 1.0, %v945
    %v947 = vxor.u32 %v896, 2147483648
    %v948 = vmul.f32 %v947, 1.442695
    %v949 = vpow.pop %v948
    %v950 = vadd.f32 %v949, 1.0
    %v951 = vrcp.pop %v950
    %v952 = vmul.f32 1.0, %v951
    %v953 = vtanh.pop %v935
    %v954 = vxor.u32 %v937, 2147483648
    %v955 = vmul.f32 %v954, 1.442695
    %v956 = vpow.pop %v955
    %v957 = vadd.f32 %v956, 1.0
    %v958 = vrcp.pop %v957
    %v959 = vmul.f32 1.0, %v958
    %v960 = vld [vmem:[%s2] sm:$0xff]
    %v961 = vmul.f32 %v952, %v960
    %v962 = vmul.f32 %v946, %v953
    %v963 = vadd.f32 %v961, %v962
    %v964 = vtanh.pop %v963
    %v965 = vmul.f32 %v959, %v964
    %966 = vst [vmem:[%s7] sm:$0xff] %v965
    %967 = vst [vmem:[%s8] sm:$0xff] %v963
    %v968 = vpack.c.bf16 %v965, %v965
    %v969 = vld [vmem:[#allocation6] sm:$0xff]
    %v970 = vld [vmem:[#allocation6 + $0x8] sm:$0xff]
    %v971 = vld [vmem:[#allocation6 + $0x10] sm:$0xff]
    %v972 = vld [vmem:[#allocation6 + $0x18] sm:$0xff]
    %v973 = vld [vmem:[#allocation6 + $0x20] sm:$0xff]
    %v974 = vld [vmem:[#allocation6 + $0x28] sm:$0xff]
    %v975 = vld [vmem:[#allocation6 + $0x30] sm:$0xff]
    %v976 = vld [vmem:[#allocation6 + $0x38] sm:$0xff]
    %v977 = vld [vmem:[#allocation6 + $0x40] sm:$0xff]
    %v978 = vld [vmem:[#allocation6 + $0x48] sm:$0xff]
    %v979 = vld [vmem:[#allocation6 + $0x50] sm:$0xff]
    %v980 = vld [vmem:[#allocation6 + $0x58] sm:$0xff]
    %v981 = vld [vmem:[#allocation6 + $0x60] sm:$0xff]
    %v982 = vld [vmem:[#allocation6 + $0x68] sm:$0xff]
    %v983 = vld [vmem:[#allocation6 + $0x70] sm:$0xff]
    %v984 = vld [vmem:[#allocation6 + $0x78] sm:$0xff]
    %v985 = vld [vmem:[#allocation6 + $0x80] sm:$0xff]
    %v986 = vld [vmem:[#allocation6 + $0x88] sm:$0xff]
    %v987 = vld [vmem:[#allocation6 + $0x90] sm:$0xff]
    %v988 = vld [vmem:[#allocation6 + $0x98] sm:$0xff]
    %v989 = vld [vmem:[#allocation6 + $0xa0] sm:$0xff]
    %v990 = vld [vmem:[#allocation6 + $0xa8] sm:$0xff]
    %v991 = vld [vmem:[#allocation6 + $0xb0] sm:$0xff]
    %v992 = vld [vmem:[#allocation6 + $0xb8] sm:$0xff]
    %v993 = vld [vmem:[#allocation6 + $0xc0] sm:$0xff]
    %v994 = vld [vmem:[#allocation6 + $0xc8] sm:$0xff]
    %v995 = vld [vmem:[#allocation6 + $0xd0] sm:$0xff]
    %v996 = vld [vmem:[#allocation6 + $0xd8] sm:$0xff]
    %v997 = vld [vmem:[#allocation6 + $0xe0] sm:$0xff]
    %v998 = vld [vmem:[#allocation6 + $0xe8] sm:$0xff]
    %v999 = vld [vmem:[#allocation6 + $0xf0] sm:$0xff]
    %v1000 = vld [vmem:[#allocation6 + $0xf8] sm:$0xff]
    %v1033 = vunpack.c.l.b16 %v969
    %v1034 = vunpack.c.h.b16 %v969
    %v1035 = vunpack.c.l.b16 %v970
    %v1036 = vunpack.c.h.b16 %v970
    %v1037 = vunpack.c.l.b16 %v971
    %v1038 = vunpack.c.h.b16 %v971
    %v1039 = vunpack.c.l.b16 %v972
    %v1040 = vunpack.c.h.b16 %v972
    %v1041 = vunpack.c.l.b16 %v973
    %v1042 = vunpack.c.h.b16 %v973
    %v1043 = vunpack.c.l.b16 %v974
    %v1044 = vunpack.c.h.b16 %v974
    %v1045 = vunpack.c.l.b16 %v975
    %v1046 = vunpack.c.h.b16 %v975
    %v1047 = vunpack.c.l.b16 %v976
    %v1048 = vunpack.c.h.b16 %v976
    %v1049 = vunpack.c.l.b16 %v977
    %v1050 = vunpack.c.h.b16 %v977
    %v1051 = vunpack.c.l.b16 %v978
    %v1052 = vunpack.c.h.b16 %v978
    %v1053 = vunpack.c.l.b16 %v979
    %v1054 = vunpack.c.h.b16 %v979
    %v1055 = vunpack.c.l.b16 %v980
    %v1056 = vunpack.c.h.b16 %v980
    %v1057 = vunpack.c.l.b16 %v981
    %v1058 = vunpack.c.h.b16 %v981
    %v1059 = vunpack.c.l.b16 %v982
    %v1060 = vunpack.c.h.b16 %v982
    %v1061 = vunpack.c.l.b16 %v983
    %v1062 = vunpack.c.h.b16 %v983
    %v1063 = vunpack.c.l.b16 %v984
    %v1064 = vunpack.c.h.b16 %v984
    %v1065 = vunpack.c.l.b16 %v985
    %v1066 = vunpack.c.h.b16 %v985
    %v1067 = vunpack.c.l.b16 %v986
    %v1068 = vunpack.c.h.b16 %v986
    %v1069 = vunpack.c.l.b16 %v987
    %v1070 = vunpack.c.h.b16 %v987
    %v1071 = vunpack.c.l.b16 %v988
    %v1072 = vunpack.c.h.b16 %v988
    %v1073 = vunpack.c.l.b16 %v989
    %v1074 = vunpack.c.h.b16 %v989
    %v1075 = vunpack.c.l.b16 %v990
    %v1076 = vunpack.c.h.b16 %v990
    %v1077 = vunpack.c.l.b16 %v991
    %v1078 = vunpack.c.h.b16 %v991
    %v1079 = vunpack.c.l.b16 %v992
    %v1080 = vunpack.c.h.b16 %v992
    %v1081 = vunpack.c.l.b16 %v993
    %v1082 = vunpack.c.h.b16 %v993
    %v1083 = vunpack.c.l.b16 %v994
    %v1084 = vunpack.c.h.b16 %v994
    %v1085 = vunpack.c.l.b16 %v995
    %v1086 = vunpack.c.h.b16 %v995
    %v1087 = vunpack.c.l.b16 %v996
    %v1088 = vunpack.c.h.b16 %v996
    %v1089 = vunpack.c.l.b16 %v997
    %v1090 = vunpack.c.h.b16 %v997
    %v1091 = vunpack.c.l.b16 %v998
    %v1092 = vunpack.c.h.b16 %v998
    %v1093 = vunpack.c.l.b16 %v999
    %v1094 = vunpack.c.h.b16 %v999
    %v1095 = vunpack.c.l.b16 %v1000
    %v1096 = vunpack.c.h.b16 %v1000
    %v1097 = vpack.c.b16 %v1037, %v1033
    %v1098 = vpack.c.b16 %v1038, %v1034
    %v1099 = vpack.c.b16 %v1039, %v1035
    %v1100 = vpack.c.b16 %v1040, %v1036
    %v1101 = vpack.c.b16 %v1045, %v1041
    %v1102 = vpack.c.b16 %v1046, %v1042
    %v1103 = vpack.c.b16 %v1047, %v1043
    %v1104 = vpack.c.b16 %v1048, %v1044
    %v1105 = vpack.c.b16 %v1053, %v1049
    %v1106 = vpack.c.b16 %v1054, %v1050
    %v1107 = vpack.c.b16 %v1055, %v1051
    %v1108 = vpack.c.b16 %v1056, %v1052
    %v1109 = vpack.c.b16 %v1061, %v1057
    %v1110 = vpack.c.b16 %v1062, %v1058
    %v1111 = vpack.c.b16 %v1063, %v1059
    %v1112 = vpack.c.b16 %v1064, %v1060
    %v1113 = vpack.c.b16 %v1069, %v1065
    %v1114 = vpack.c.b16 %v1070, %v1066
    %v1115 = vpack.c.b16 %v1071, %v1067
    %v1116 = vpack.c.b16 %v1072, %v1068
    %v1117 = vpack.c.b16 %v1077, %v1073
    %v1118 = vpack.c.b16 %v1078, %v1074
    %v1119 = vpack.c.b16 %v1079, %v1075
    %v1120 = vpack.c.b16 %v1080, %v1076
    %v1121 = vpack.c.b16 %v1085, %v1081
    %v1122 = vpack.c.b16 %v1086, %v1082
    %v1123 = vpack.c.b16 %v1087, %v1083
    %v1124 = vpack.c.b16 %v1088, %v1084
    %v1125 = vpack.c.b16 %v1093, %v1089
    %v1126 = vpack.c.b16 %v1094, %v1090
    %v1127 = vpack.c.b16 %v1095, %v1091
    %v1128 = vpack.c.b16 %v1096, %v1092
    %1161 = vmatprep.subr.bf16.mxu0 %v1126
    %1162 = vmatpush1.bf16.msra.mxu0 %v1125
    %1163 = vmatprep.subr.bf16.mxu0 %v1122
    %1164 = vmatpush1.bf16.msra.mxu0 %v1121
    %1165 = vmatprep.subr.bf16.mxu0 %v1118
    %1166 = vmatpush1.bf16.msra.mxu0 %v1117
    %1167 = vmatprep.subr.bf16.mxu0 %v1114
    %1168 = vmatpush1.bf16.msra.mxu0 %v1113
    %1169 = vmatprep.subr.bf16.mxu0 %v1110
    %1170 = vmatpush1.bf16.msra.mxu0 %v1109
    %1171 = vmatprep.subr.bf16.mxu0 %v1106
    %1172 = vmatpush1.bf16.msra.mxu0 %v1105
    %1173 = vmatprep.subr.bf16.mxu0 %v1102
    %1174 = vmatpush1.bf16.msra.mxu0 %v1101
    %1175 = vmatprep.subr.bf16.mxu0 %v1098
    %1176 = vmatpush1.bf16.msra.mxu0 %v1097
    %1177 = vmatprep.subr.bf16.mxu0 0
    %1178 = vmatpush2.bf16.msra.mxu0 0
    %1179 = vmatprep.subr.bf16.mxu0 0
    %1180 = vmatpush2.bf16.msra.mxu0 0
    %1181 = vmatprep.subr.bf16.mxu0 0
    %1182 = vmatpush2.bf16.msra.mxu0 0
    %1183 = vmatprep.subr.bf16.mxu0 0
    %1184 = vmatpush2.bf16.msra.mxu0 0
    %1185 = vmatprep.subr.bf16.mxu0 0
    %1186 = vmatpush2.bf16.msra.mxu0 0
    %1187 = vmatprep.subr.bf16.mxu0 0
    %1188 = vmatpush2.bf16.msra.mxu0 0
    %1189 = vmatprep.subr.bf16.mxu0 0
    %1190 = vmatpush2.bf16.msra.mxu0 0
    %1191 = vmatprep.subr.bf16.mxu0 0
    %1192 = vmatpush2.bf16.msra.mxu0 0
    %1193 = vmatprep.mubr.bf16.mxu0 0
    %1194 = vmatmul.mubr.bf16.gmra.mxu0 %v968
    %v1195 = vpop.f32.mrf.mxu0
    %v1196 = vadd.f32 %v619, %v1195
    %v1197 = vpop.f32.mrf.mxu0
    %v1198 = vadd.f32 %v621, %v1197
    %v1199 = vpop.f32.mrf.mxu0
    %v1200 = vpop.f32.mrf.mxu0
    %1201 = vdwg.mxu0
    %1202 = vmatprep.subr.bf16.mxu0 %v1128
    %1203 = vmatpush1.bf16.msra.mxu0 %v1127
    %1204 = vmatprep.subr.bf16.mxu0 %v1124
    %1205 = vmatpush1.bf16.msra.mxu0 %v1123
    %1206 = vmatprep.subr.bf16.mxu0 %v1120
    %1207 = vmatpush1.bf16.msra.mxu0 %v1119
    %1208 = vmatprep.subr.bf16.mxu0 %v1116
    %1209 = vmatpush1.bf16.msra.mxu0 %v1115
    %1210 = vmatprep.subr.bf16.mxu0 %v1112
    %1211 = vmatpush1.bf16.msra.mxu0 %v1111
    %1212 = vmatprep.subr.bf16.mxu0 %v1108
    %1213 = vmatpush1.bf16.msra.mxu0 %v1107
    %1214 = vmatprep.subr.bf16.mxu0 %v1104
    %1215 = vmatpush1.bf16.msra.mxu0 %v1103
    %1216 = vmatprep.subr.bf16.mxu0 %v1100
    %1217 = vmatpush1.bf16.msra.mxu0 %v1099
    %1218 = vmatprep.subr.bf16.mxu0 0
    %1219 = vmatpush2.bf16.msra.mxu0 0
    %1220 = vmatprep.subr.bf16.mxu0 0
    %1221 = vmatpush2.bf16.msra.mxu0 0
    %1222 = vmatprep.subr.bf16.mxu0 0
    %1223 = vmatpush2.bf16.msra.mxu0 0
    %1224 = vmatprep.subr.bf16.mxu0 0
    %1225 = vmatpush2.bf16.msra.mxu0 0
    %1226 = vmatprep.subr.bf16.mxu0 0
    %1227 = vmatpush2.bf16.msra.mxu0 0
    %1228 = vmatprep.subr.bf16.mxu0 0
    %1229 = vmatpush2.bf16.msra.mxu0 0
    %1230 = vmatprep.subr.bf16.mxu0 0
    %1231 = vmatpush2.bf16.msra.mxu0 0
    %1232 = vmatprep.subr.bf16.mxu0 0
    %1233 = vmatpush2.bf16.msra.mxu0 0
    %1234 = vmatprep.mubr.bf16.mxu0 0
    %1235 = vmatmul.mubr.bf16.gmra.mxu0 %v968
    %v1236 = vpop.f32.mrf.mxu0
    %v1237 = vadd.f32 %v660, %v1236
    %v1238 = vpop.f32.mrf.mxu0
    %v1239 = vadd.f32 %v662, %v1238
    %v1240 = vpop.f32.mrf.mxu0
    %v1241 = vpop.f32.mrf.mxu0
    %1242 = vdwg.mxu0
    %v1243 = vxor.u32 %v1196, 2147483648
    %v1244 = vmul.f32 %v1243, 1.442695
    %v1245 = vpow.pop %v1244
    %v1246 = vadd.f32 %v1245, 1.0
    %v1247 = vrcp.pop %v1246
    %v1248 = vmul.f32 1.0, %v1247
    %v1249 = vxor.u32 %v1198, 2147483648
    %v1250 = vmul.f32 %v1249, 1.442695
    %v1251 = vpow.pop %v1250
    %v1252 = vadd.f32 %v1251, 1.0
    %v1253 = vrcp.pop %v1252
    %v1254 = vmul.f32 1.0, %v1253
    %v1255 = vtanh.pop %v1237
    %v1256 = vxor.u32 %v1239, 2147483648
    %v1257 = vmul.f32 %v1256, 1.442695
    %v1258 = vpow.pop %v1257
    %v1259 = vadd.f32 %v1258, 1.0
    %v1260 = vrcp.pop %v1259
    %v1261 = vmul.f32 1.0, %v1260
    %s1262 = scalar_lea.vmem %s2, 8
    %v1263 = vld [vmem:[%s1262] sm:$0xff]
    %v1264 = vmul.f32 %v1254, %v1263
    %v1265 = vmul.f32 %v1248, %v1255
    %v1266 = vadd.f32 %v1264, %v1265
    %v1267 = vtanh.pop %v1266
    %v1268 = vmul.f32 %v1261, %v1267
    %s1269 = scalar_lea.vmem %s7, 8
    %1270 = vst [vmem:[%s1269] sm:$0xff] %v1268
    %s1271 = scalar_lea.vmem %s8, 8
    %1272 = vst [vmem:[%s1271] sm:$0xff] %v1266
    // Predicated region
    $region42: #{_decoder_forward_impl.2} parent=1 // pred_check
      _
    $region43: #{_decoder_forward_impl.2} parent=1 // pred_check_branch
      %1274 = sbr.rel (0) target = $region45
    $region44: #{_decoder_forward_impl.2} parent=1 // pred_region
      _
    $region45: #{_decoder_forward_impl.2} parent=1 // pred_fallthru
      _
    // Predicated region
    $region46: #{_decoder_forward_impl.2} parent=1 // pred_check
      _
    $region47: #{_decoder_forward_impl.2} parent=1 // pred_check_branch
      %1276 = sbr.rel (0) target = $region49
    $region48: #{_decoder_forward_impl.2} parent=1 // pred_region
      _
    $region49: #{_decoder_forward_impl.2} parent=1 // pred_fallthru
      _
    // Predicated region
    $region50: #{_decoder_forward_impl.2} parent=1 // pred_check
      _
    $region51: #{_decoder_forward_impl.2} parent=1 // pred_check_branch
      %1278 = sbr.rel (0) target = $region53
    $region52: #{_decoder_forward_impl.2} parent=1 // pred_region
      _
    $region53: #{_decoder_forward_impl.2} parent=1 // pred_fallthru
      _
    // Predicated region
    $region54: #{_decoder_forward_impl.2} parent=1 // pred_check
      _
    $region55: #{_decoder_forward_impl.2} parent=1 // pred_check_branch
      %1280 = sbr.rel (0) target = $region57
    $region56: #{_decoder_forward_impl.2} parent=1 // pred_region
      _
    $region57: #{_decoder_forward_impl.2} parent=1 // pred_fallthru
      _
    %1281 = vsyncpa [#allocation3], 1
    %1282 = vsyncpa [#allocation5], 1

</llo_original>
